<compile_context>
chip_gen: v5e
topology: v5e:2x2
jax: 0.10.0
libtpu: 0.0.40
codegen_flags: <defaults>
</compile_context>

<pallas_src>
import functools

import jax
import jax.numpy as jnp
from jax.experimental import pallas as pl
from jax.experimental.pallas import tpu as pltpu

BN_EPS = 1e-5
LANE = 128                      # lane width / K & Cout padding granularity
VMEM_LIMIT = 32 * 1024 * 1024   # safe scoped-VMEM limit on v5e/v6e/v7x


def _round_up(x, m):
    return ((x + m - 1) // m) * m


def _pad_axis(x, axis, target, value=0.0):
    if x.shape[axis] == target:
        return x
    widths = [(0, 0)] * x.ndim
    widths[axis] = (0, target - x.shape[axis])
    return jnp.pad(x, widths, constant_values=value)


def _pick_tm(m, cap=512):
    """Largest row tile <= cap that gives >= 2 grid steps (megacore / v7x's 2nd
    TensorCore) with <= 15% row-padding waste; falls back to 8 for tiny M."""
    for tm in (512, 256, 128, 64, 32, 16, 8):
        if tm > cap:
            continue
        m_pad = _round_up(m, tm)
        if m_pad // tm >= 2 and (m_pad - m) <= 0.15 * m_pad:
            return tm
    return 8


# ---------------------------------------------------------------------------
# Pallas kernels
# ---------------------------------------------------------------------------
def _mm_bias_kernel(p_ref, w_ref, b_ref, o_ref, *, relu):
    # Single (tm, K)@(K, Cout_pad) MXU dot, f32 accumulation, bias (+ReLU)
    # epilogue.  BN scale is pre-folded into the weight columns; K and Cout
    # grid axes are collapsed (K_pad <= 384 for this backbone).
    y = jnp.dot(p_ref[...], w_ref[...], preferred_element_type=jnp.float32)
    y = y + b_ref[...]
    if relu:
        y = jnp.maximum(y, 0.0)
    o_ref[...] = y.astype(o_ref.dtype)


def _mm_bias_res_kernel(p_ref, w_ref, b_ref, r_ref, o_ref):
    # Same, with residual add (bf16 upcast to f32) before the ReLU.
    y = jnp.dot(p_ref[...], w_ref[...], preferred_element_type=jnp.float32)
    y = y + b_ref[...] + r_ref[...].astype(jnp.float32)
    o_ref[...] = jnp.maximum(y, 0.0).astype(o_ref.dtype)


def _max9_kernel(x_ref, o_ref):
    # (9, tm, 128) -> (tm, 128): window axis outermost, tree max over 9 full
    # (tm, 128) loads -> pure VPU max ops, no cross-sublane XLU reduce.
    m = x_ref[0]
    for t in range(1, 9):
        m = jnp.maximum(m, x_ref[t])
    o_ref[...] = m


def _mean_reduce_kernel(x_ref, o_ref):
    # (1, HW, C) -> (1, 1, C): spatial mean in f32, C lane-dense (128).
    o_ref[...] = jnp.mean(x_ref[...].astype(jnp.float32), axis=1, keepdims=True)


# ---------------------------------------------------------------------------
# Pallas wrappers
# ---------------------------------------------------------------------------
def fused_conv_matmul(patches, wmat, bias, residual=None, relu=True, tm=128):
    """(M_pad, K_pad)bf16 @ (K_pad, Cout_pad)bf16 + bias (+res) (+ReLU) -> bf16."""
    m_pad, k_pad = patches.shape
    cout_pad = wmat.shape[1]
    grid = (m_pad // tm,)

    in_specs = [
        pl.BlockSpec((tm, k_pad), lambda i: (i, 0)),        # patches (M tile)
        pl.BlockSpec((k_pad, cout_pad), lambda i: (0, 0)),  # scaled weights
        pl.BlockSpec((1, cout_pad), lambda i: (0, 0)),      # folded BN bias
    ]
    args = [patches, wmat, bias]
    if residual is None:
        kernel = functools.partial(_mm_bias_kernel, relu=relu)
    else:
        kernel = _mm_bias_res_kernel
        in_specs.append(pl.BlockSpec((tm, cout_pad), lambda i: (i, 0)))
        args.append(residual)

    return pl.pallas_call(
        kernel,
        out_shape=jax.ShapeDtypeStruct((m_pad, cout_pad), jnp.bfloat16),
        grid=grid,
        in_specs=in_specs,
        out_specs=pl.BlockSpec((tm, cout_pad), lambda i: (i, 0)),
        compiler_params=pltpu.CompilerParams(
            dimension_semantics=("parallel",),
            vmem_limit_bytes=VMEM_LIMIT,
        ),
    )(*args)


def pallas_window_max9(stacked, tr):
    """(9, rows_pad, 128) -> (rows_pad, 128) tree max over the window axis."""
    _, rows_pad, c = stacked.shape
    return pl.pallas_call(
        _max9_kernel,
        out_shape=jax.ShapeDtypeStruct((rows_pad, c), stacked.dtype),
        grid=(rows_pad // tr,),
        in_specs=[pl.BlockSpec((9, tr, c), lambda i: (0, i, 0))],
        out_specs=pl.BlockSpec((tr, c), lambda i: (i, 0)),
        compiler_params=pltpu.CompilerParams(
            dimension_semantics=("parallel",),
            vmem_limit_bytes=VMEM_LIMIT,
        ),
    )(stacked)


def pallas_spatial_mean(x_nlc):
    """(N, HW, C) -> (N, 1, C) f32 mean over the spatial axis, C lane-dense."""
    n, hw, c = x_nlc.shape
    return pl.pallas_call(
        _mean_reduce_kernel,
        out_shape=jax.ShapeDtypeStruct((n, 1, c), jnp.float32),
        grid=(n,),
        in_specs=[pl.BlockSpec((1, hw, c), lambda i: (i, 0, 0))],
        out_specs=pl.BlockSpec((1, 1, c), lambda i: (i, 0, 0)),
        compiler_params=pltpu.CompilerParams(
            dimension_semantics=("parallel",),
            vmem_limit_bytes=VMEM_LIMIT,
        ),
    )(x_nlc)


# ---------------------------------------------------------------------------
# Glue: im2col patch extraction, BN folding, network wiring (plain JAX)
# ---------------------------------------------------------------------------
def _extract_patches(x_nhwc, kh, kw, stride, pad, pad_value=0.0):
    n, h, w, c = x_nhwc.shape
    xp = jnp.pad(x_nhwc, ((0, 0), (pad, pad), (pad, pad), (0, 0)),
                 constant_values=pad_value)
    ho = (h + 2 * pad - kh) // stride + 1
    wo = (w + 2 * pad - kw) // stride + 1
    cols = []
    for di in range(kh):
        for dj in range(kw):
            cols.append(xp[:, di:di + stride * ho:stride,
                           dj:dj + stride * wo:stride, :])
    patches = jnp.stack(cols, axis=3)                # (N, Ho, Wo, kh*kw, C)
    return patches, (n, ho, wo)


def _fold_bn(gamma, beta, mean, var):
    scale = gamma / jnp.sqrt(var + BN_EPS)
    bias = beta - mean * scale
    return scale.reshape(1, -1), bias.reshape(1, -1)


def conv_bn_act(x_nhwc, conv_w, bn, stride, pad, relu=True, residual=None,
                keep_cout_pad=False):
    """Conv + folded BN (+ residual) (+ ReLU); bf16 activations, real channel
    counts in HBM (the output keeps the padded 128 channels only on request)."""
    cout, cin, kh, kw = conv_w.shape
    n, h, w, c_in = x_nhwc.shape
    assert c_in == cin

    # --- im2col over the REAL channels (K = kh*kw*C_real, padded to 128) -----
    # TODO(synk): fuse this window gather into the matmul kernel to avoid the
    # kh*kw patch-matrix materialization in HBM.
    if kh == 1 and kw == 1 and pad == 0:
        xs = x_nhwc[:, ::stride, ::stride, :]
        _, ho, wo, _ = xs.shape
        patches = xs.reshape(n * ho * wo, cin)
    else:
        p5, (_, ho, wo) = _extract_patches(x_nhwc, kh, kw, stride, pad)
        patches = p5.reshape(n * ho * wo, kh * kw * cin)

    m = n * ho * wo
    k = patches.shape[1]
    k_pad = _round_up(k, LANE)            # <= 384 here -> single K block
    cout_pad = _round_up(cout, LANE)
    tm = _pick_tm(m)
    m_pad = _round_up(m, tm)

    patches = _pad_axis(_pad_axis(patches, 1, k_pad), 0, m_pad)
    patches = patches.astype(jnp.bfloat16)

    # PyTorch weight (Cout, Cin, kh, kw) -> (kh*kw*Cin, Cout); fold the BN
    # scale into the columns, then pad K rows / Cout cols to 128 (pad cols get
    # weight=0, bias=0 -> output exactly 0 there).
    scale, bias = _fold_bn(*bn)
    wmat = jnp.transpose(conv_w, (2, 3, 1, 0)).reshape(kh * kw * cin, cout)
    wmat = wmat * scale
    wmat = _pad_axis(_pad_axis(wmat, 0, k_pad), 1, cout_pad).astype(jnp.bfloat16)
    bias = _pad_axis(bias, 1, cout_pad)

    res_flat = None
    if residual is not None:
        res_flat = residual.reshape(m, residual.shape[-1]).astype(jnp.bfloat16)
        res_flat = _pad_axis(_pad_axis(res_flat, 1, cout_pad), 0, m_pad)

    out = fused_conv_matmul(patches, wmat, bias, residual=res_flat,
                            relu=relu, tm=tm)
    if keep_cout_pad:
        return out[:m].reshape(n, ho, wo, cout_pad)
    return out[:m, :cout].reshape(n, ho, wo, cout)


def maxpool3x3_s2(x_nhwc):
    """MaxPool2d(kernel=3, stride=2, padding=1) with -inf padding semantics."""
    n, h, w, c = x_nhwc.shape
    ho = (h + 2 - 3) // 2 + 1
    wo = (w + 2 - 3) // 2 + 1
    xp = jnp.pad(x_nhwc, ((0, 0), (1, 1), (1, 1), (0, 0)),
                 constant_values=-jnp.inf)
    taps = []
    for di in range(3):
        for dj in range(3):
            taps.append(xp[:, di:di + 2 * ho:2, dj:dj + 2 * wo:2, :].reshape(-1))
    flat = jnp.stack(taps, axis=0)                        # (9, N*Ho*Wo*C)

    # The max is elementwise over the tap axis, so flatten each tap to a
    # lane-dense (rows, 128) slab -> no masked 16-wide lanes.
    l_real = n * ho * wo * c
    rows = -(-l_real // LANE)
    tr = _pick_tm(rows)
    rows_pad = _round_up(rows, tr)
    flat = _pad_axis(flat, 1, rows_pad * LANE, value=0.0)  # pad rows sliced off
    stacked = flat.reshape(9, rows_pad, LANE)

    out = pallas_window_max9(stacked, tr)                  # (rows_pad, 128) bf16
    return out.reshape(-1)[:l_real].reshape(n, ho, wo, c)


def global_avg_pool(x_nhwc_padded, c_real):
    n, h, w, c = x_nhwc_padded.shape                       # c = 128-padded
    out = pallas_spatial_mean(x_nhwc_padded.reshape(n, h * w, c))  # (N,1,C) f32
    out = out.reshape(n, c)[:, :c_real]                    # drop padded channels
    return out.reshape(n, c_real, 1, 1)   # matches AdaptiveAvgPool2d((1, 1))


# ---------------------------------------------------------------------------
# Deterministic parameter initialization (synthetic "pretrained" weights)
# ---------------------------------------------------------------------------
def _conv_init(key, cout, cin, kh, kw):
    return 0.1 * jax.random.normal(key, (cout, cin, kh, kw), jnp.float32)


def _bn_init(key, c):
    k1, k2, k3, k4 = jax.random.split(key, 4)
    gamma = 1.0 + 0.1 * jax.random.normal(k1, (c,), jnp.float32)
    beta = 0.1 * jax.random.normal(k2, (c,), jnp.float32)
    mean = 0.1 * jax.random.normal(k3, (c,), jnp.float32)
    var = 1.0 + 0.1 * jnp.abs(jax.random.normal(k4, (c,), jnp.float32))
    return gamma, beta, mean, var


def init_params(key, cin=3, c1=16, c2=32):
    ks = jax.random.split(key, 16)
    return {
        "stem_w": _conv_init(ks[0], c1, cin, 7, 7), "stem_bn": _bn_init(ks[1], c1),
        "b1_w1": _conv_init(ks[2], c1, c1, 3, 3),   "b1_bn1": _bn_init(ks[3], c1),
        "b1_w2": _conv_init(ks[4], c1, c1, 3, 3),   "b1_bn2": _bn_init(ks[5], c1),
        "b2_w1": _conv_init(ks[6], c2, c1, 3, 3),   "b2_bn1": _bn_init(ks[7], c2),
        "b2_w2": _conv_init(ks[8], c2, c2, 3, 3),   "b2_bn2": _bn_init(ks[9], c2),
        "b2_wd": _conv_init(ks[10], c2, c1, 1, 1),  "b2_bnd": _bn_init(ks[11], c2),
    }


# ---------------------------------------------------------------------------
# CLIP_FE / ResNet_FE forward (frozen, eval mode)
# ---------------------------------------------------------------------------
def clip_fe_forward(x_nchw, p):
    c_out_real = p["b2_w2"].shape[0]

    # NCHW (PyTorch convention) -> NHWC internal layout.
    x = jnp.transpose(x_nchw, (0, 2, 3, 1)).astype(jnp.float32)

    # stem: conv7x7/s2 + BN + ReLU, then maxpool3x3/s2
    x = conv_bn_act(x, p["stem_w"], p["stem_bn"], stride=2, pad=3, relu=True)
    x = maxpool3x3_s2(x)
    # TODO(synk): fuse the maxpool into the stem conv epilogue (one less HBM trip).

    # BasicBlock 1 (stride 1, identity shortcut)
    identity = x
    y = conv_bn_act(x, p["b1_w1"], p["b1_bn1"], stride=1, pad=1, relu=True)
    x = conv_bn_act(y, p["b1_w2"], p["b1_bn2"], stride=1, pad=1,
                    residual=identity)

    # BasicBlock 2 (stride 2, 1x1 downsample shortcut -- no im2col needed).
    # Downsample output keeps the padded 128 channels (fed straight back as the
    # residual operand), and the final conv keeps them too so the global-mean
    # kernel is lane-dense.
    ds = conv_bn_act(x, p["b2_wd"], p["b2_bnd"], stride=2, pad=0, relu=False,
                     keep_cout_pad=True)
    y = conv_bn_act(x, p["b2_w1"], p["b2_bn1"], stride=2, pad=1, relu=True)
    x = conv_bn_act(y, p["b2_w2"], p["b2_bn2"], stride=1, pad=1, residual=ds,
                    keep_cout_pad=True)

    # global average pool -> (N, C, 1, 1), matching children()[:-1] of a ResNet.
    # TODO(synk): could be fused into the last conv's epilogue (single M tile).
    return global_avg_pool(x, c_out_real)


if __name__ == "__main__":
    key = jax.random.PRNGKey(0)
    k_param, k_x = jax.random.split(key)
    params = init_params(k_param)
    x = jax.random.normal(k_x, (2, 3, 16, 16), jnp.float32)  # NCHW input

    out = jax.jit(clip_fe_forward)(x, params)
    out = jax.block_until_ready(out)

    assert out.shape == (2, 32, 1, 1), out.shape
    assert jnp.all(jnp.isfinite(out))
    print("KERNEL_OK")
</pallas_src>

<mosaic_0001>
module attributes {stable_mosaic.version = 11 : i64} {
  func.func @_mm_bias_kernel(%arg0: i32, %arg1: memref<64x256xbf16, #tpu.memory_space<vmem>>, %arg2: memref<256x128xbf16, #tpu.memory_space<vmem>>, %arg3: memref<1x128xf32, #tpu.memory_space<vmem>>, %arg4: memref<64x128xbf16, #tpu.memory_space<vmem>>) attributes {dimension_semantics = [#tpu.dimension_semantics<parallel>], iteration_bounds = array<i64: 2>, scalar_prefetch = 0 : i64, scratch_operands = 0 : i64, tpu.core_type = #tpu.core_type<tc>, window_params = [{transform_indices = @transform_0, window_bounds = array<i64: 64, 256>}, {pipeline_mode = #tpu.pipeline_mode<synchronous>, transform_indices = @transform_1, window_bounds = array<i64: 256, 128>}, {pipeline_mode = #tpu.pipeline_mode<synchronous>, transform_indices = @transform_2, window_bounds = array<i64: 1, 128>}, {transform_indices = @transform_3, window_bounds = array<i64: 64, 128>}]} {
    %c0 = arith.constant 0 : index
    %c0_0 = arith.constant 0 : index
    %0 = vector.load %arg1[%c0, %c0_0] : memref<64x256xbf16, #tpu.memory_space<vmem>>, vector<64x256xbf16>
    %c0_1 = arith.constant 0 : index
    %c0_2 = arith.constant 0 : index
    %1 = vector.load %arg2[%c0_1, %c0_2] : memref<256x128xbf16, #tpu.memory_space<vmem>>, vector<256x128xbf16>
    %cst = arith.constant dense<0.000000e+00> : vector<64x128xf32>
    %2 = tpu.matmul %0, %1, %cst {dimension_numbers = #tpu.dot_dimension_numbers<[1], [0], [0], [1], [0, 0, 1, 1], [], []>} : vector<64x256xbf16>, vector<256x128xbf16>, vector<64x128xf32> -> vector<64x128xf32>
    %c0_3 = arith.constant 0 : index
    %c0_4 = arith.constant 0 : index
    %3 = vector.load %arg3[%c0_3, %c0_4] : memref<1x128xf32, #tpu.memory_space<vmem>>, vector<1x128xf32>
    %4 = vector.broadcast %3 : vector<1x128xf32> to vector<64x128xf32>
    %5 = arith.addf %2, %4 : vector<64x128xf32>
    %cst_5 = arith.constant 0.000000e+00 : f32
    %6 = vector.broadcast %cst_5 : f32 to vector<64x128xf32>
    %7 = arith.maximumf %5, %6 : vector<64x128xf32>
    %8 = arith.truncf %7 : vector<64x128xf32> to vector<64x128xbf16>
    %c0_6 = arith.constant 0 : index
    %c0_7 = arith.constant 0 : index
    %9 = vector.load %arg4[%c0_6, %c0_7] : memref<64x128xbf16, #tpu.memory_space<vmem>>, vector<64x128xbf16>
    tpu.vector_store %arg4[%c0_6, %c0_7], %8 {strides = array<i32>} : memref<64x128xbf16, #tpu.memory_space<vmem>>, vector<64x128xbf16>,
    return
  }
  func.func @transform_0(%arg0: i32) -> (i32, i32) {
    %c0_i32 = arith.constant 0 : i32
    %c0_i32_0 = arith.constant 0 : i32
    return %arg0, %c0_i32 : i32, i32
  }
  func.func @transform_1(%arg0: i32) -> (i32, i32) {
    %c0_i32 = arith.constant 0 : i32
    %c0_i32_0 = arith.constant 0 : i32
    %c0_i32_1 = arith.constant 0 : i32
    return %c0_i32, %c0_i32_0 : i32, i32
  }
  func.func @transform_2(%arg0: i32) -> (i32, i32) {
    %c0_i32 = arith.constant 0 : i32
    %c0_i32_0 = arith.constant 0 : i32
    %c0_i32_1 = arith.constant 0 : i32
    return %c0_i32, %c0_i32_0 : i32, i32
  }
  func.func @transform_3(%arg0: i32) -> (i32, i32) {
    %c0_i32 = arith.constant 0 : i32
    %c0_i32_0 = arith.constant 0 : i32
    return %arg0, %c0_i32 : i32, i32
  }
}

module attributes {stable_mosaic.version = 11 : i64} {
  func.func @_max9_kernel(%arg0: i32, %arg1: memref<9x8x128xbf16, #tpu.memory_space<vmem>>, %arg2: memref<8x128xbf16, #tpu.memory_space<vmem>>) attributes {dimension_semantics = [#tpu.dimension_semantics<parallel>], iteration_bounds = array<i64: 1>, scalar_prefetch = 0 : i64, scratch_operands = 0 : i64, tpu.core_type = #tpu.core_type<tc>, window_params = [{transform_indices = @transform_0, window_bounds = array<i64: 9, 8, 128>}, {transform_indices = @transform_1, window_bounds = array<i64: 8, 128>}]} {
    %c0 = arith.constant 0 : index
    %c0_0 = arith.constant 0 : index
    %c0_1 = arith.constant 0 : index
    %0 = vector.load %arg1[%c0, %c0_0, %c0_1] : memref<9x8x128xbf16, #tpu.memory_space<vmem>>, vector<1x8x128xbf16>
    %1 = vector.shape_cast %0 : vector<1x8x128xbf16> to vector<8x128xbf16>
    %c1 = arith.constant 1 : index
    %c0_2 = arith.constant 0 : index
    %c0_3 = arith.constant 0 : index
    %2 = vector.load %arg1[%c1, %c0_2, %c0_3] : memref<9x8x128xbf16, #tpu.memory_space<vmem>>, vector<1x8x128xbf16>
    %3 = vector.shape_cast %2 : vector<1x8x128xbf16> to vector<8x128xbf16>
    %4 = arith.maximumf %1, %3 : vector<8x128xbf16>
    %c2 = arith.constant 2 : index
    %c0_4 = arith.constant 0 : index
    %c0_5 = arith.constant 0 : index
    %5 = vector.load %arg1[%c2, %c0_4, %c0_5] : memref<9x8x128xbf16, #tpu.memory_space<vmem>>, vector<1x8x128xbf16>
    %6 = vector.shape_cast %5 : vector<1x8x128xbf16> to vector<8x128xbf16>
    %7 = arith.maximumf %4, %6 : vector<8x128xbf16>
    %c3 = arith.constant 3 : index
    %c0_6 = arith.constant 0 : index
    %c0_7 = arith.constant 0 : index
    %8 = vector.load %arg1[%c3, %c0_6, %c0_7] : memref<9x8x128xbf16, #tpu.memory_space<vmem>>, vector<1x8x128xbf16>
    %9 = vector.shape_cast %8 : vector<1x8x128xbf16> to vector<8x128xbf16>
    %10 = arith.maximumf %7, %9 : vector<8x128xbf16>
    %c4 = arith.constant 4 : index
    %c0_8 = arith.constant 0 : index
    %c0_9 = arith.constant 0 : index
    %11 = vector.load %arg1[%c4, %c0_8, %c0_9] : memref<9x8x128xbf16, #tpu.memory_space<vmem>>, vector<1x8x128xbf16>
    %12 = vector.shape_cast %11 : vector<1x8x128xbf16> to vector<8x128xbf16>
    %13 = arith.maximumf %10, %12 : vector<8x128xbf16>
    %c5 = arith.constant 5 : index
    %c0_10 = arith.constant 0 : index
    %c0_11 = arith.constant 0 : index
    %14 = vector.load %arg1[%c5, %c0_10, %c0_11] : memref<9x8x128xbf16, #tpu.memory_space<vmem>>, vector<1x8x128xbf16>
    %15 = vector.shape_cast %14 : vector<1x8x128xbf16> to vector<8x128xbf16>
    %16 = arith.maximumf %13, %15 : vector<8x128xbf16>
    %c6 = arith.constant 6 : index
    %c0_12 = arith.constant 0 : index
    %c0_13 = arith.constant 0 : index
    %17 = vector.load %arg1[%c6, %c0_12, %c0_13] : memref<9x8x128xbf16, #tpu.memory_space<vmem>>, vector<1x8x128xbf16>
    %18 = vector.shape_cast %17 : vector<1x8x128xbf16> to vector<8x128xbf16>
    %19 = arith.maximumf %16, %18 : vector<8x128xbf16>
    %c7 = arith.constant 7 : index
    %c0_14 = arith.constant 0 : index
    %c0_15 = arith.constant 0 : index
    %20 = vector.load %arg1[%c7, %c0_14, %c0_15] : memref<9x8x128xbf16, #tpu.memory_space<vmem>>, vector<1x8x128xbf16>
    %21 = vector.shape_cast %20 : vector<1x8x128xbf16> to vector<8x128xbf16>
    %22 = arith.maximumf %19, %21 : vector<8x128xbf16>
    %c8 = arith.constant 8 : index
    %c0_16 = arith.constant 0 : index
    %c0_17 = arith.constant 0 : index
    %23 = vector.load %arg1[%c8, %c0_16, %c0_17] : memref<9x8x128xbf16, #tpu.memory_space<vmem>>, vector<1x8x128xbf16>
    %24 = vector.shape_cast %23 : vector<1x8x128xbf16> to vector<8x128xbf16>
    %25 = arith.maximumf %22, %24 : vector<8x128xbf16>
    %c0_18 = arith.constant 0 : index
    %c0_19 = arith.constant 0 : index
    %26 = vector.load %arg2[%c0_18, %c0_19] : memref<8x128xbf16, #tpu.memory_space<vmem>>, vector<8x128xbf16>
    tpu.vector_store %arg2[%c0_18, %c0_19], %25 {strides = array<i32>} : memref<8x128xbf16, #tpu.memory_space<vmem>>, vector<8x128xbf16>,
    return
  }
  func.func @transform_0(%arg0: i32) -> (i32, i32, i32) {
    %c0_i32 = arith.constant 0 : i32
    %c0_i32_0 = arith.constant 0 : i32
    %c0_i32_1 = arith.constant 0 : i32
    return %c0_i32, %arg0, %c0_i32_0 : i32, i32, i32
  }
  func.func @transform_1(%arg0: i32) -> (i32, i32) {
    %c0_i32 = arith.constant 0 : i32
    %c0_i32_0 = arith.constant 0 : i32
    return %arg0, %c0_i32 : i32, i32
  }
}

module attributes {stable_mosaic.version = 11 : i64} {
  func.func @_mm_bias_kernel(%arg0: i32, %arg1: memref<16x256xbf16, #tpu.memory_space<vmem>>, %arg2: memref<256x128xbf16, #tpu.memory_space<vmem>>, %arg3: memref<1x128xf32, #tpu.memory_space<vmem>>, %arg4: memref<16x128xbf16, #tpu.memory_space<vmem>>) attributes {dimension_semantics = [#tpu.dimension_semantics<parallel>], iteration_bounds = array<i64: 2>, scalar_prefetch = 0 : i64, scratch_operands = 0 : i64, tpu.core_type = #tpu.core_type<tc>, window_params = [{transform_indices = @transform_0, window_bounds = array<i64: 16, 256>}, {pipeline_mode = #tpu.pipeline_mode<synchronous>, transform_indices = @transform_1, window_bounds = array<i64: 256, 128>}, {pipeline_mode = #tpu.pipeline_mode<synchronous>, transform_indices = @transform_2, window_bounds = array<i64: 1, 128>}, {transform_indices = @transform_3, window_bounds = array<i64: 16, 128>}]} {
    %c0 = arith.constant 0 : index
    %c0_0 = arith.constant 0 : index
    %0 = vector.load %arg1[%c0, %c0_0] : memref<16x256xbf16, #tpu.memory_space<vmem>>, vector<16x256xbf16>
    %c0_1 = arith.constant 0 : index
    %c0_2 = arith.constant 0 : index
    %1 = vector.load %arg2[%c0_1, %c0_2] : memref<256x128xbf16, #tpu.memory_space<vmem>>, vector<256x128xbf16>
    %cst = arith.constant dense<0.000000e+00> : vector<16x128xf32>
    %2 = tpu.matmul %0, %1, %cst {dimension_numbers = #tpu.dot_dimension_numbers<[1], [0], [0], [1], [0, 0, 1, 1], [], []>} : vector<16x256xbf16>, vector<256x128xbf16>, vector<16x128xf32> -> vector<16x128xf32>
    %c0_3 = arith.constant 0 : index
    %c0_4 = arith.constant 0 : index
    %3 = vector.load %arg3[%c0_3, %c0_4] : memref<1x128xf32, #tpu.memory_space<vmem>>, vector<1x128xf32>
    %4 = vector.broadcast %3 : vector<1x128xf32> to vector<16x128xf32>
    %5 = arith.addf %2, %4 : vector<16x128xf32>
    %cst_5 = arith.constant 0.000000e+00 : f32
    %6 = vector.broadcast %cst_5 : f32 to vector<16x128xf32>
    %7 = arith.maximumf %5, %6 : vector<16x128xf32>
    %8 = arith.truncf %7 : vector<16x128xf32> to vector<16x128xbf16>
    %c0_6 = arith.constant 0 : index
    %c0_7 = arith.constant 0 : index
    %9 = vector.load %arg4[%c0_6, %c0_7] : memref<16x128xbf16, #tpu.memory_space<vmem>>, vector<16x128xbf16>
    tpu.vector_store %arg4[%c0_6, %c0_7], %8 {strides = array<i32>} : memref<16x128xbf16, #tpu.memory_space<vmem>>, vector<16x128xbf16>,
    return
  }
  func.func @transform_0(%arg0: i32) -> (i32, i32) {
    %c0_i32 = arith.constant 0 : i32
    %c0_i32_0 = arith.constant 0 : i32
    return %arg0, %c0_i32 : i32, i32
  }
  func.func @transform_1(%arg0: i32) -> (i32, i32) {
    %c0_i32 = arith.constant 0 : i32
    %c0_i32_0 = arith.constant 0 : i32
    %c0_i32_1 = arith.constant 0 : i32
    return %c0_i32, %c0_i32_0 : i32, i32
  }
  func.func @transform_2(%arg0: i32) -> (i32, i32) {
    %c0_i32 = arith.constant 0 : i32
    %c0_i32_0 = arith.constant 0 : i32
    %c0_i32_1 = arith.constant 0 : i32
    return %c0_i32, %c0_i32_0 : i32, i32
  }
  func.func @transform_3(%arg0: i32) -> (i32, i32) {
    %c0_i32 = arith.constant 0 : i32
    %c0_i32_0 = arith.constant 0 : i32
    return %arg0, %c0_i32 : i32, i32
  }
}

module attributes {stable_mosaic.version = 11 : i64} {
  func.func @_mm_bias_res_kernel(%arg0: i32, %arg1: memref<16x256xbf16, #tpu.memory_space<vmem>>, %arg2: memref<256x128xbf16, #tpu.memory_space<vmem>>, %arg3: memref<1x128xf32, #tpu.memory_space<vmem>>, %arg4: memref<16x128xbf16, #tpu.memory_space<vmem>>, %arg5: memref<16x128xbf16, #tpu.memory_space<vmem>>) attributes {dimension_semantics = [#tpu.dimension_semantics<parallel>], iteration_bounds = array<i64: 2>, scalar_prefetch = 0 : i64, scratch_operands = 0 : i64, tpu.core_type = #tpu.core_type<tc>, window_params = [{transform_indices = @transform_0, window_bounds = array<i64: 16, 256>}, {pipeline_mode = #tpu.pipeline_mode<synchronous>, transform_indices = @transform_1, window_bounds = array<i64: 256, 128>}, {pipeline_mode = #tpu.pipeline_mode<synchronous>, transform_indices = @transform_2, window_bounds = array<i64: 1, 128>}, {transform_indices = @transform_3, window_bounds = array<i64: 16, 128>}, {transform_indices = @transform_4, window_bounds = array<i64: 16, 128>}]} {
    %c0 = arith.constant 0 : index
    %c0_0 = arith.constant 0 : index
    %0 = vector.load %arg1[%c0, %c0_0] : memref<16x256xbf16, #tpu.memory_space<vmem>>, vector<16x256xbf16>
    %c0_1 = arith.constant 0 : index
    %c0_2 = arith.constant 0 : index
    %1 = vector.load %arg2[%c0_1, %c0_2] : memref<256x128xbf16, #tpu.memory_space<vmem>>, vector<256x128xbf16>
    %cst = arith.constant dense<0.000000e+00> : vector<16x128xf32>
    %2 = tpu.matmul %0, %1, %cst {dimension_numbers = #tpu.dot_dimension_numbers<[1], [0], [0], [1], [0, 0, 1, 1], [], []>} : vector<16x256xbf16>, vector<256x128xbf16>, vector<16x128xf32> -> vector<16x128xf32>
    %c0_3 = arith.constant 0 : index
    %c0_4 = arith.constant 0 : index
    %3 = vector.load %arg3[%c0_3, %c0_4] : memref<1x128xf32, #tpu.memory_space<vmem>>, vector<1x128xf32>
    %4 = vector.broadcast %3 : vector<1x128xf32> to vector<16x128xf32>
    %5 = arith.addf %2, %4 : vector<16x128xf32>
    %c0_5 = arith.constant 0 : index
    %c0_6 = arith.constant 0 : index
    %6 = vector.load %arg4[%c0_5, %c0_6] : memref<16x128xbf16, #tpu.memory_space<vmem>>, vector<16x128xbf16>
    %7 = arith.extf %6 : vector<16x128xbf16> to vector<16x128xf32>
    %8 = arith.addf %5, %7 : vector<16x128xf32>
    %cst_7 = arith.constant 0.000000e+00 : f32
    %9 = vector.broadcast %cst_7 : f32 to vector<16x128xf32>
    %10 = arith.maximumf %8, %9 : vector<16x128xf32>
    %11 = arith.truncf %10 : vector<16x128xf32> to vector<16x128xbf16>
    %c0_8 = arith.constant 0 : index
    %c0_9 = arith.constant 0 : index
    %12 = vector.load %arg5[%c0_8, %c0_9] : memref<16x128xbf16, #tpu.memory_space<vmem>>, vector<16x128xbf16>
    tpu.vector_store %arg5[%c0_8, %c0_9], %11 {strides = array<i32>} : memref<16x128xbf16, #tpu.memory_space<vmem>>, vector<16x128xbf16>,
    return
  }
  func.func @transform_0(%arg0: i32) -> (i32, i32) {
    %c0_i32 = arith.constant 0 : i32
    %c0_i32_0 = arith.constant 0 : i32
    return %arg0, %c0_i32 : i32, i32
  }
  func.func @transform_1(%arg0: i32) -> (i32, i32) {
    %c0_i32 = arith.constant 0 : i32
    %c0_i32_0 = arith.constant 0 : i32
    %c0_i32_1 = arith.constant 0 : i32
    return %c0_i32, %c0_i32_0 : i32, i32
  }
  func.func @transform_2(%arg0: i32) -> (i32, i32) {
    %c0_i32 = arith.constant 0 : i32
    %c0_i32_0 = arith.constant 0 : i32
    %c0_i32_1 = arith.constant 0 : i32
    return %c0_i32, %c0_i32_0 : i32, i32
  }
  func.func @transform_3(%arg0: i32) -> (i32, i32) {
    %c0_i32 = arith.constant 0 : i32
    %c0_i32_0 = arith.constant 0 : i32
    return %arg0, %c0_i32 : i32, i32
  }
  func.func @transform_4(%arg0: i32) -> (i32, i32) {
    %c0_i32 = arith.constant 0 : i32
    %c0_i32_0 = arith.constant 0 : i32
    return %arg0, %c0_i32 : i32, i32
  }
}

module attributes {stable_mosaic.version = 11 : i64} {
  func.func @_mm_bias_kernel(%arg0: i32, %arg1: memref<8x256xbf16, #tpu.memory_space<vmem>>, %arg2: memref<256x128xbf16, #tpu.memory_space<vmem>>, %arg3: memref<1x128xf32, #tpu.memory_space<vmem>>, %arg4: memref<8x128xbf16, #tpu.memory_space<vmem>>) attributes {dimension_semantics = [#tpu.dimension_semantics<parallel>], iteration_bounds = array<i64: 1>, scalar_prefetch = 0 : i64, scratch_operands = 0 : i64, tpu.core_type = #tpu.core_type<tc>, window_params = [{transform_indices = @transform_0, window_bounds = array<i64: 8, 256>}, {pipeline_mode = #tpu.pipeline_mode<synchronous>, transform_indices = @transform_1, window_bounds = array<i64: 256, 128>}, {pipeline_mode = #tpu.pipeline_mode<synchronous>, transform_indices = @transform_2, window_bounds = array<i64: 1, 128>}, {transform_indices = @transform_3, window_bounds = array<i64: 8, 128>}]} {
    %c0 = arith.constant 0 : index
    %c0_0 = arith.constant 0 : index
    %0 = vector.load %arg1[%c0, %c0_0] : memref<8x256xbf16, #tpu.memory_space<vmem>>, vector<8x256xbf16>
    %c0_1 = arith.constant 0 : index
    %c0_2 = arith.constant 0 : index
    %1 = vector.load %arg2[%c0_1, %c0_2] : memref<256x128xbf16, #tpu.memory_space<vmem>>, vector<256x128xbf16>
    %cst = arith.constant dense<0.000000e+00> : vector<8x128xf32>
    %2 = tpu.matmul %0, %1, %cst {dimension_numbers = #tpu.dot_dimension_numbers<[1], [0], [0], [1], [0, 0, 1, 1], [], []>} : vector<8x256xbf16>, vector<256x128xbf16>, vector<8x128xf32> -> vector<8x128xf32>
    %c0_3 = arith.constant 0 : index
    %c0_4 = arith.constant 0 : index
    %3 = vector.load %arg3[%c0_3, %c0_4] : memref<1x128xf32, #tpu.memory_space<vmem>>, vector<1x128xf32>
    %4 = vector.broadcast %3 : vector<1x128xf32> to vector<8x128xf32>
    %5 = arith.addf %2, %4 : vector<8x128xf32>
    %cst_5 = arith.constant 0.000000e+00 : f32
    %6 = vector.broadcast %cst_5 : f32 to vector<8x128xf32>
    %7 = arith.maximumf %5, %6 : vector<8x128xf32>
    %8 = arith.truncf %7 : vector<8x128xf32> to vector<8x128xbf16>
    %c0_6 = arith.constant 0 : index
    %c0_7 = arith.constant 0 : index
    %9 = vector.load %arg4[%c0_6, %c0_7] : memref<8x128xbf16, #tpu.memory_space<vmem>>, vector<8x128xbf16>
    tpu.vector_store %arg4[%c0_6, %c0_7], %8 {strides = array<i32>} : memref<8x128xbf16, #tpu.memory_space<vmem>>, vector<8x128xbf16>,
    return
  }
  func.func @transform_0(%arg0: i32) -> (i32, i32) {
    %c0_i32 = arith.constant 0 : i32
    %c0_i32_0 = arith.constant 0 : i32
    return %arg0, %c0_i32 : i32, i32
  }
  func.func @transform_1(%arg0: i32) -> (i32, i32) {
    %c0_i32 = arith.constant 0 : i32
    %c0_i32_0 = arith.constant 0 : i32
    %c0_i32_1 = arith.constant 0 : i32
    return %c0_i32, %c0_i32_0 : i32, i32
  }
  func.func @transform_2(%arg0: i32) -> (i32, i32) {
    %c0_i32 = arith.constant 0 : i32
    %c0_i32_0 = arith.constant 0 : i32
    %c0_i32_1 = arith.constant 0 : i32
    return %c0_i32, %c0_i32_0 : i32, i32
  }
  func.func @transform_3(%arg0: i32) -> (i32, i32) {
    %c0_i32 = arith.constant 0 : i32
    %c0_i32_0 = arith.constant 0 : i32
    return %arg0, %c0_i32 : i32, i32
  }
}

module attributes {stable_mosaic.version = 11 : i64} {
  func.func @_mm_bias_kernel(%arg0: i32, %arg1: memref<8x128xbf16, #tpu.memory_space<vmem>>, %arg2: memref<128x128xbf16, #tpu.memory_space<vmem>>, %arg3: memref<1x128xf32, #tpu.memory_space<vmem>>, %arg4: memref<8x128xbf16, #tpu.memory_space<vmem>>) attributes {dimension_semantics = [#tpu.dimension_semantics<parallel>], iteration_bounds = array<i64: 1>, scalar_prefetch = 0 : i64, scratch_operands = 0 : i64, tpu.core_type = #tpu.core_type<tc>, window_params = [{transform_indices = @transform_0, window_bounds = array<i64: 8, 128>}, {pipeline_mode = #tpu.pipeline_mode<synchronous>, transform_indices = @transform_1, window_bounds = array<i64: 128, 128>}, {pipeline_mode = #tpu.pipeline_mode<synchronous>, transform_indices = @transform_2, window_bounds = array<i64: 1, 128>}, {transform_indices = @transform_3, window_bounds = array<i64: 8, 128>}]} {
    %c0 = arith.constant 0 : index
    %c0_0 = arith.constant 0 : index
    %0 = vector.load %arg1[%c0, %c0_0] : memref<8x128xbf16, #tpu.memory_space<vmem>>, vector<8x128xbf16>
    %c0_1 = arith.constant 0 : index
    %c0_2 = arith.constant 0 : index
    %1 = vector.load %arg2[%c0_1, %c0_2] : memref<128x128xbf16, #tpu.memory_space<vmem>>, vector<128x128xbf16>
    %cst = arith.constant dense<0.000000e+00> : vector<8x128xf32>
    %2 = tpu.matmul %0, %1, %cst {dimension_numbers = #tpu.dot_dimension_numbers<[1], [0], [0], [1], [0, 0, 1, 1], [], []>} : vector<8x128xbf16>, vector<128x128xbf16>, vector<8x128xf32> -> vector<8x128xf32>
    %c0_3 = arith.constant 0 : index
    %c0_4 = arith.constant 0 : index
    %3 = vector.load %arg3[%c0_3, %c0_4] : memref<1x128xf32, #tpu.memory_space<vmem>>, vector<1x128xf32>
    %4 = vector.broadcast %3 : vector<1x128xf32> to vector<8x128xf32>
    %5 = arith.addf %2, %4 : vector<8x128xf32>
    %6 = arith.truncf %5 : vector<8x128xf32> to vector<8x128xbf16>
    %c0_5 = arith.constant 0 : index
    %c0_6 = arith.constant 0 : index
    %7 = vector.load %arg4[%c0_5, %c0_6] : memref<8x128xbf16, #tpu.memory_space<vmem>>, vector<8x128xbf16>
    tpu.vector_store %arg4[%c0_5, %c0_6], %6 {strides = array<i32>} : memref<8x128xbf16, #tpu.memory_space<vmem>>, vector<8x128xbf16>,
    return
  }
  func.func @transform_0(%arg0: i32) -> (i32, i32) {
    %c0_i32 = arith.constant 0 : i32
    %c0_i32_0 = arith.constant 0 : i32
    return %arg0, %c0_i32 : i32, i32
  }
  func.func @transform_1(%arg0: i32) -> (i32, i32) {
    %c0_i32 = arith.constant 0 : i32
    %c0_i32_0 = arith.constant 0 : i32
    %c0_i32_1 = arith.constant 0 : i32
    return %c0_i32, %c0_i32_0 : i32, i32
  }
  func.func @transform_2(%arg0: i32) -> (i32, i32) {
    %c0_i32 = arith.constant 0 : i32
    %c0_i32_0 = arith.constant 0 : i32
    %c0_i32_1 = arith.constant 0 : i32
    return %c0_i32, %c0_i32_0 : i32, i32
  }
  func.func @transform_3(%arg0: i32) -> (i32, i32) {
    %c0_i32 = arith.constant 0 : i32
    %c0_i32_0 = arith.constant 0 : i32
    return %arg0, %c0_i32 : i32, i32
  }
}

module attributes {stable_mosaic.version = 11 : i64} {
  func.func @_mean_reduce_kernel(%arg0: i32, %arg1: memref<1x4x128xbf16, #tpu.memory_space<vmem>>, %arg2: memref<1x1x128xf32, #tpu.memory_space<vmem>>) attributes {dimension_semantics = [#tpu.dimension_semantics<parallel>], iteration_bounds = array<i64: 2>, scalar_prefetch = 0 : i64, scratch_operands = 0 : i64, tpu.core_type = #tpu.core_type<tc>, window_params = [{transform_indices = @transform_0, window_bounds = array<i64: 1, 4, 128>}, {transform_indices = @transform_1, window_bounds = array<i64: 1, 1, 128>}]} {
    %c0 = arith.constant 0 : index
    %c0_0 = arith.constant 0 : index
    %c0_1 = arith.constant 0 : index
    %0 = vector.load %arg1[%c0, %c0_0, %c0_1] : memref<1x4x128xbf16, #tpu.memory_space<vmem>>, vector<1x4x128xbf16>
    %1 = arith.extf %0 : vector<1x4x128xbf16> to vector<1x4x128xf32>
    %cst = arith.constant dense<0.000000e+00> : vector<1x128xf32>
    %2 = vector.multi_reduction <add>, %1, %cst [1] : vector<1x4x128xf32> to vector<1x128xf32>
    %3 = vector.shape_cast %2 : vector<1x128xf32> to vector<1x1x128xf32>
    %cst_2 = arith.constant 4.000000e+00 : f32
    %4 = vector.broadcast %cst_2 : f32 to vector<1x1x128xf32>
    %5 = arith.divf %3, %4 : vector<1x1x128xf32>
    %c0_3 = arith.constant 0 : index
    %c0_4 = arith.constant 0 : index
    %c0_5 = arith.constant 0 : index
    %6 = vector.load %arg2[%c0_3, %c0_4, %c0_5] : memref<1x1x128xf32, #tpu.memory_space<vmem>>, vector<1x1x128xf32>
    tpu.vector_store %arg2[%c0_3, %c0_4, %c0_5], %5 {strides = array<i32>} : memref<1x1x128xf32, #tpu.memory_space<vmem>>, vector<1x1x128xf32>,
    return
  }
  func.func @transform_0(%arg0: i32) -> (i32, i32, i32) {
    %c0_i32 = arith.constant 0 : i32
    %c0_i32_0 = arith.constant 0 : i32
    %c0_i32_1 = arith.constant 0 : i32
    return %arg0, %c0_i32, %c0_i32_0 : i32, i32, i32
  }
  func.func @transform_1(%arg0: i32) -> (i32, i32, i32) {
    %c0_i32 = arith.constant 0 : i32
    %c0_i32_0 = arith.constant 0 : i32
    %c0_i32_1 = arith.constant 0 : i32
    return %arg0, %c0_i32, %c0_i32_0 : i32, i32, i32
  }
}

module attributes {stable_mosaic.version = 11 : i64} {
  func.func @_mm_bias_res_kernel(%arg0: i32, %arg1: memref<8x384xbf16, #tpu.memory_space<vmem>>, %arg2: memref<384x128xbf16, #tpu.memory_space<vmem>>, %arg3: memref<1x128xf32, #tpu.memory_space<vmem>>, %arg4: memref<8x128xbf16, #tpu.memory_space<vmem>>, %arg5: memref<8x128xbf16, #tpu.memory_space<vmem>>) attributes {dimension_semantics = [#tpu.dimension_semantics<parallel>], iteration_bounds = array<i64: 1>, scalar_prefetch = 0 : i64, scratch_operands = 0 : i64, tpu.core_type = #tpu.core_type<tc>, window_params = [{transform_indices = @transform_0, window_bounds = array<i64: 8, 384>}, {pipeline_mode = #tpu.pipeline_mode<synchronous>, transform_indices = @transform_1, window_bounds = array<i64: 384, 128>}, {pipeline_mode = #tpu.pipeline_mode<synchronous>, transform_indices = @transform_2, window_bounds = array<i64: 1, 128>}, {transform_indices = @transform_3, window_bounds = array<i64: 8, 128>}, {transform_indices = @transform_4, window_bounds = array<i64: 8, 128>}]} {
    %c0 = arith.constant 0 : index
    %c0_0 = arith.constant 0 : index
    %0 = vector.load %arg1[%c0, %c0_0] : memref<8x384xbf16, #tpu.memory_space<vmem>>, vector<8x384xbf16>
    %c0_1 = arith.constant 0 : index
    %c0_2 = arith.constant 0 : index
    %1 = vector.load %arg2[%c0_1, %c0_2] : memref<384x128xbf16, #tpu.memory_space<vmem>>, vector<384x128xbf16>
    %cst = arith.constant dense<0.000000e+00> : vector<8x128xf32>
    %2 = tpu.matmul %0, %1, %cst {dimension_numbers = #tpu.dot_dimension_numbers<[1], [0], [0], [1], [0, 0, 1, 1], [], []>} : vector<8x384xbf16>, vector<384x128xbf16>, vector<8x128xf32> -> vector<8x128xf32>
    %c0_3 = arith.constant 0 : index
    %c0_4 = arith.constant 0 : index
    %3 = vector.load %arg3[%c0_3, %c0_4] : memref<1x128xf32, #tpu.memory_space<vmem>>, vector<1x128xf32>
    %4 = vector.broadcast %3 : vector<1x128xf32> to vector<8x128xf32>
    %5 = arith.addf %2, %4 : vector<8x128xf32>
    %c0_5 = arith.constant 0 : index
    %c0_6 = arith.constant 0 : index
    %6 = vector.load %arg4[%c0_5, %c0_6] : memref<8x128xbf16, #tpu.memory_space<vmem>>, vector<8x128xbf16>
    %7 = arith.extf %6 : vector<8x128xbf16> to vector<8x128xf32>
    %8 = arith.addf %5, %7 : vector<8x128xf32>
    %cst_7 = arith.constant 0.000000e+00 : f32
    %9 = vector.broadcast %cst_7 : f32 to vector<8x128xf32>
    %10 = arith.maximumf %8, %9 : vector<8x128xf32>
    %11 = arith.truncf %10 : vector<8x128xf32> to vector<8x128xbf16>
    %c0_8 = arith.constant 0 : index
    %c0_9 = arith.constant 0 : index
    %12 = vector.load %arg5[%c0_8, %c0_9] : memref<8x128xbf16, #tpu.memory_space<vmem>>, vector<8x128xbf16>
    tpu.vector_store %arg5[%c0_8, %c0_9], %11 {strides = array<i32>} : memref<8x128xbf16, #tpu.memory_space<vmem>>, vector<8x128xbf16>,
    return
  }
  func.func @transform_0(%arg0: i32) -> (i32, i32) {
    %c0_i32 = arith.constant 0 : i32
    %c0_i32_0 = arith.constant 0 : i32
    return %arg0, %c0_i32 : i32, i32
  }
  func.func @transform_1(%arg0: i32) -> (i32, i32) {
    %c0_i32 = arith.constant 0 : i32
    %c0_i32_0 = arith.constant 0 : i32
    %c0_i32_1 = arith.constant 0 : i32
    return %c0_i32, %c0_i32_0 : i32, i32
  }
  func.func @transform_2(%arg0: i32) -> (i32, i32) {
    %c0_i32 = arith.constant 0 : i32
    %c0_i32_0 = arith.constant 0 : i32
    %c0_i32_1 = arith.constant 0 : i32
    return %c0_i32, %c0_i32_0 : i32, i32
  }
  func.func @transform_3(%arg0: i32) -> (i32, i32) {
    %c0_i32 = arith.constant 0 : i32
    %c0_i32_0 = arith.constant 0 : i32
    return %arg0, %c0_i32 : i32, i32
  }
  func.func @transform_4(%arg0: i32) -> (i32, i32) {
    %c0_i32 = arith.constant 0 : i32
    %c0_i32_0 = arith.constant 0 : i32
    return %arg0, %c0_i32 : i32, i32
  }
}

</mosaic_0001>

<llo_original>
// kernel: clip_fe_forward.8
$region0: #{clip_fe_forward.8}
  #allocation0 [shape = 'u32[]', space=smem, size = 0x4, offset = 0x4, fixed_abs, tag = 'smem constant byte address 0x4 - core index']
  #allocation1 [shape = 'u32[72,128]{1,0:T(1,128)}', space=vmem, size = 0x9000, scoped, tag = 'internal scratch']
  %s0 = inlined_call_operand.vmem [shape: bf16[128,256], index: 0, kind: input, shape index: {}]
  %s1 = inlined_call_operand.vmem [shape: bf16[256,128], index: 1, kind: input, shape index: {}]
  %s2 = inlined_call_operand.vmem [shape: f32[1,128], index: 2, kind: input, shape index: {}]
  %s3 = inlined_call_operand.vmem [shape: bf16[128,128], index: 3, kind: output, shape index: {}]
  %s4 = sld [smem:[#allocation0]]
  $region45: #{clip_fe_forward.8} parent=0
    _
  %s6 = ssub.s32 1, %s4
  %s7 = scalar_select 0, %s6, %s4
  loop: start=0, step=1, limit=4
  $region2: #{clip_fe_forward.8} parent=0 // loop_pre_header
    _
  $region3: #{clip_fe_forward.8} parent=0 // loop_header
    %s9 = sphi 0, %s13
    %p10 = scmp.ge.s32.totalorder %s9, 4
    %s19 = sphi 0, %s21
    %s22 = sphi 0, %s19
    %s23 = sphi 0, %s22
    %s39 = sphi 0, %s23
    %s43 = sphi 0, %s43
    %s45 = sphi 0, %s43
    %s46 = sphi 0, %s45
    %s60 = sphi 0, %s46
    %s64 = sphi 0, %s64
    %s66 = sphi 0, %s64
    %s67 = sphi 0, %s66
    %s81 = sphi 0, %s67
    %s87 = sphi 0, %s89
    %s90 = sphi 0, %s87
    %s91 = sphi 0, %s90
    %s107 = sphi 0, %s91
  $region4: #{clip_fe_forward.8} parent=0 // loop_header_branch
    %12 = sbr.rel (%p10) target = $region8
  $region5: #{clip_fe_forward.8} parent=0 // loop_body
    %s14 = ssub.s32 %s9, 1
    %s15 = ssub.s32 %s9, 2
    %s16 = sadd.s32 %s9, 1
    %s17 = ssub.s32 %s9, %s16
    %p18 = scmp.eq.s32.totalorder %s17, 0
    %s20 = sadd.s32 %s19, 1
    %s21 = scalar_select %p18, %s19, %s20
    %p24 = pneg %p18
    %p25 = scmp.eq.s32.totalorder %s9, 1
    %p26 = por %p24, %p25
    %p27 = scmp.ne.s32.totalorder %s19, %s22
    %p28 = scmp.eq.s32.totalorder %s9, 0
    %p29 = por %p27, %p28
    %p30 = scmp.ne.s32.totalorder %s19, %s22
    %p31 = scmp.eq.s32.totalorder %s14, 1
    %p32 = por %p30, %p31
    %p33 = scmp.ne.s32.totalorder %s22, %s23
    %p34 = scmp.eq.s32.totalorder %s14, 0
    %p35 = por %p33, %p34
    %p36 = scmp.ne.s32.totalorder %s22, %s23
    %p37 = scmp.eq.s32.totalorder %s15, 1
    %p38 = por %p36, %p37
    %p40 = scmp.ne.s32.totalorder %s23, %s39
    %p41 = scmp.eq.s32.totalorder %s15, 0
    %p42 = por %p40, %p41
    %s44 = sadd.s32 %s43, 1
    %p47 = scmp.eq.s32.totalorder %s9, 1
    %p48 = scmp.ne.s32.totalorder %s43, %s45
    %p49 = scmp.eq.s32.totalorder %s9, 0
    %p50 = por %p48, %p49
    %p51 = scmp.ne.s32.totalorder %s43, %s45
    %p52 = scmp.eq.s32.totalorder %s14, 1
    %p53 = por %p51, %p52
    %p54 = scmp.ne.s32.totalorder %s45, %s46
    %p55 = scmp.eq.s32.totalorder %s14, 0
    %p56 = por %p54, %p55
    %p57 = scmp.ne.s32.totalorder %s45, %s46
    %p58 = scmp.eq.s32.totalorder %s15, 1
    %p59 = por %p57, %p58
    %p61 = scmp.ne.s32.totalorder %s46, %s60
    %p62 = scmp.eq.s32.totalorder %s15, 0
    %p63 = por %p61, %p62
    %s65 = sadd.s32 %s64, 1
    %p68 = scmp.eq.s32.totalorder %s9, 1
    %p69 = scmp.ne.s32.totalorder %s64, %s66
    %p70 = scmp.eq.s32.totalorder %s9, 0
    %p71 = por %p69, %p70
    %p72 = scmp.ne.s32.totalorder %s64, %s66
    %p73 = scmp.eq.s32.totalorder %s14, 1
    %p74 = por %p72, %p73
    %p75 = scmp.ne.s32.totalorder %s66, %s67
    %p76 = scmp.eq.s32.totalorder %s14, 0
    %p77 = por %p75, %p76
    %p78 = scmp.ne.s32.totalorder %s66, %s67
    %p79 = scmp.eq.s32.totalorder %s15, 1
    %p80 = por %p78, %p79
    %p82 = scmp.ne.s32.totalorder %s67, %s81
    %p83 = scmp.eq.s32.totalorder %s15, 0
    %p84 = por %p82, %p83
    %s85 = ssub.s32 %s9, %s16
    %p86 = scmp.eq.s32.totalorder %s85, 0
    %s88 = sadd.s32 %s87, 1
    %s89 = scalar_select %p86, %s87, %s88
    %p92 = pneg %p86
    %p93 = scmp.eq.s32.totalorder %s9, 1
    %p94 = por %p92, %p93
    %p95 = scmp.ne.s32.totalorder %s87, %s90
    %p96 = scmp.eq.s32.totalorder %s9, 0
    %p97 = por %p95, %p96
    %p98 = scmp.ne.s32.totalorder %s87, %s90
    %p99 = scmp.eq.s32.totalorder %s14, 1
    %p100 = por %p98, %p99
    %p101 = scmp.ne.s32.totalorder %s90, %s91
    %p102 = scmp.eq.s32.totalorder %s14, 0
    %p103 = por %p101, %p102
    %p104 = scmp.ne.s32.totalorder %s90, %s91
    %p105 = scmp.eq.s32.totalorder %s15, 1
    %p106 = por %p104, %p105
    %p108 = scmp.ne.s32.totalorder %s91, %s107
    %p109 = scmp.eq.s32.totalorder %s15, 0
    %p110 = por %p108, %p109
    %p111 = scmp.le.s32.totalorder 1, %s9
    %p112 = scmp.lt.s32.totalorder %s9, 3
    %p113 = pnand %p111, %p112
    %p114 = pneg %p113
    // Predicated region
    $region9: #{clip_fe_forward.8} parent=5 // pred_check
      _
    $region10: #{clip_fe_forward.8} parent=5 // pred_check_branch
      %116 = sbr.rel (%p113) target = $region12
    $region11: #{clip_fe_forward.8} parent=5 // pred_region
      %s117 = ssub.s32 %s9, 1
      // Predicated region
      $region13: #{clip_fe_forward.8} parent=11 // pred_check
        %p118 = pneg %p56
      $region14: #{clip_fe_forward.8} parent=11 // pred_check_branch
        %120 = sbr.rel (%p118) target = $region16
      $region15: #{clip_fe_forward.8} parent=11 // pred_region
        _
      $region16: #{clip_fe_forward.8} parent=11 // pred_fallthru
        _
      // Predicated region
      $region17: #{clip_fe_forward.8} parent=11 // pred_check
        %p121 = pneg %p77
      $region18: #{clip_fe_forward.8} parent=11 // pred_check_branch
        %123 = sbr.rel (%p121) target = $region20
      $region19: #{clip_fe_forward.8} parent=11 // pred_region
        _
      $region20: #{clip_fe_forward.8} parent=11 // pred_fallthru
        _
    $region12: #{clip_fe_forward.8} parent=5 // pred_fallthru
      _
    %p124 = scmp.lt.s32.totalorder %s9, 2
    // Predicated region
    $region21: #{clip_fe_forward.8} parent=5 // pred_check
      %p125 = pneg %p124
    $region22: #{clip_fe_forward.8} parent=5 // pred_check_branch
      %127 = sbr.rel (%p125) target = $region24
    $region23: #{clip_fe_forward.8} parent=5 // pred_region
      // Predicated region
      $region25: #{clip_fe_forward.8} parent=23 // pred_check
        %p128 = pneg %p29
      $region26: #{clip_fe_forward.8} parent=23 // pred_check_branch
        %130 = sbr.rel (%p128) target = $region28
      $region27: #{clip_fe_forward.8} parent=23 // pred_region
        %s131 = smul.u32 8, %s9
        %p132 = scmp.lt.s32.totalorder %s131, 15
        %s133 = scalar_select %p132, %s131, 15
        %s134 = smul.addr %s133, 2
        %s135 = smul.addr %s134, 4
        %s136 = scalar_lea.vmem %s0, %s135
        %s137 = smul.u32 8, %s9
      $region28: #{clip_fe_forward.8} parent=23 // pred_fallthru
        _
    $region24: #{clip_fe_forward.8} parent=5 // pred_fallthru
      _
    %p138 = scmp.le.s32.totalorder 1, %s9
    %p139 = scmp.lt.s32.totalorder %s9, 3
    %p140 = pnand %p138, %p139
    %p141 = pneg %p140
    // Predicated region
    $region29: #{clip_fe_forward.8} parent=5 // pred_check
      _
    $region30: #{clip_fe_forward.8} parent=5 // pred_check_branch
      %143 = sbr.rel (%p140) target = $region32
    $region31: #{clip_fe_forward.8} parent=5 // pred_region
      %s144 = ssub.s32 %s9, 1
      %s145 = smul.u32 8, %s14
      %p146 = scmp.lt.s32.totalorder %s145, 15
      %s147 = scalar_select %p146, %s145, 15
      %s148 = smul.addr %s147, 2
      %s149 = smul.addr %s148, 4
      %s150 = scalar_lea.vmem %s0, %s149
      %p151 = pneg %p35
      %p152 = pneg %p32
      %p153 = pneg %p56
      %p154 = pneg %p53
      %p155 = pneg %p77
      %p156 = pneg %p74
      %p157 = pneg %p103
      %p158 = pneg %p100
      %s159 = smul.u32 8, %s14
      %p160 = scmp.lt.s32.totalorder %s159, 15
      %s161 = scalar_select %p160, %s159, 15
      %s162 = smul.addr %s161, 4
      %s163 = scalar_lea.vmem %s3, %s162
      %s164 = smul.u32 8, %s14
      %p165 = scmp.lt.s32.totalorder %s164, 15
      %s166 = scalar_select %p165, %s164, 15
      %s167 = smul.addr %s166, 2
      %s168 = smul.addr %s167, 4
      %s169 = scalar_lea.vmem %s0, %s168
      %s170 = smul.u32 8, %s14
      %s171 = smul.u32 8, %s14
      %p172 = scmp.lt.s32.totalorder %s171, 15
      %s173 = scalar_select %p172, %s171, 15
      %s174 = smul.addr %s173, 4
      %s175 = scalar_lea.vmem %s3, %s174
      %s176 = smul.u32 8, %s14
      %v177 = vld [vmem:[%s169] sm:$0xff]
      %v178 = vld [vmem:[%s169 + $0x8] sm:$0xff]
      %v179 = vld [vmem:[%s169 + $0x10] sm:$0xff]
      %v180 = vld [vmem:[%s169 + $0x18] sm:$0xff]
      %v181 = vld [vmem:[%s169 + $0x20] sm:$0xff]
      %v182 = vld [vmem:[%s169 + $0x28] sm:$0xff]
      %v183 = vld [vmem:[%s169 + $0x30] sm:$0xff]
      %v184 = vld [vmem:[%s169 + $0x38] sm:$0xff]
      %v185 = vld [vmem:[%s1] sm:$0xf]
      %v186 = vld [vmem:[%s1 + $0x4] sm:$0xf]
      %v187 = vld [vmem:[%s1 + $0x8] sm:$0xf]
      %v188 = vld [vmem:[%s1 + $0xc] sm:$0xf]
      %v189 = vld [vmem:[%s1 + $0x10] sm:$0xf]
      %v190 = vld [vmem:[%s1 + $0x14] sm:$0xf]
      %v191 = vld [vmem:[%s1 + $0x18] sm:$0xf]
      %v192 = vld [vmem:[%s1 + $0x1c] sm:$0xf]
      %v193 = vld [vmem:[%s1 + $0x20] sm:$0xf]
      %v194 = vld [vmem:[%s1 + $0x24] sm:$0xf]
      %v195 = vld [vmem:[%s1 + $0x28] sm:$0xf]
      %v196 = vld [vmem:[%s1 + $0x2c] sm:$0xf]
      %v197 = vld [vmem:[%s1 + $0x30] sm:$0xf]
      %v198 = vld [vmem:[%s1 + $0x34] sm:$0xf]
      %v199 = vld [vmem:[%s1 + $0x38] sm:$0xf]
      %v200 = vld [vmem:[%s1 + $0x3c] sm:$0xf]
      %v201 = vld [vmem:[%s1 + $0x40] sm:$0xf]
      %v202 = vld [vmem:[%s1 + $0x44] sm:$0xf]
      %v203 = vld [vmem:[%s1 + $0x48] sm:$0xf]
      %v204 = vld [vmem:[%s1 + $0x4c] sm:$0xf]
      %v205 = vld [vmem:[%s1 + $0x50] sm:$0xf]
      %v206 = vld [vmem:[%s1 + $0x54] sm:$0xf]
      %v207 = vld [vmem:[%s1 + $0x58] sm:$0xf]
      %v208 = vld [vmem:[%s1 + $0x5c] sm:$0xf]
      %v209 = vld [vmem:[%s1 + $0x60] sm:$0xf]
      %v210 = vld [vmem:[%s1 + $0x64] sm:$0xf]
      %v211 = vld [vmem:[%s1 + $0x68] sm:$0xf]
      %v212 = vld [vmem:[%s1 + $0x6c] sm:$0xf]
      %v213 = vld [vmem:[%s1 + $0x70] sm:$0xf]
      %v214 = vld [vmem:[%s1 + $0x74] sm:$0xf]
      %v215 = vld [vmem:[%s1 + $0x78] sm:$0xf]
      %v216 = vld [vmem:[%s1 + $0x7c] sm:$0xf]
      %v217 = vld [vmem:[%s2] sm:$0x1]
      %v219 = vperm.slane %v217, 0
      %v229 = vunpack.c.l.b16 %v177
      %v230 = vunpack.c.h.b16 %v177
      %v231 = vunpack.c.l.b16 %v178
      %v232 = vunpack.c.h.b16 %v178
      %v233 = vunpack.c.l.b16 %v179
      %v234 = vunpack.c.h.b16 %v179
      %v235 = vunpack.c.l.b16 %v180
      %v236 = vunpack.c.h.b16 %v180
      %v237 = vunpack.c.l.b16 %v181
      %v238 = vunpack.c.h.b16 %v181
      %v239 = vunpack.c.l.b16 %v182
      %v240 = vunpack.c.h.b16 %v182
      %v241 = vunpack.c.l.b16 %v183
      %v242 = vunpack.c.h.b16 %v183
      %v243 = vunpack.c.l.b16 %v184
      %v244 = vunpack.c.h.b16 %v184
      %v245 = vpack.c.b16 %v231, %v229
      %v246 = vpack.c.b16 %v232, %v230
      %v247 = vpack.c.b16 %v235, %v233
      %v248 = vpack.c.b16 %v236, %v234
      %v249 = vpack.c.b16 %v239, %v237
      %v250 = vpack.c.b16 %v240, %v238
      %v251 = vpack.c.b16 %v243, %v241
      %v252 = vpack.c.b16 %v244, %v242
      %v293 = vunpack.c.l.b16 %v185
      %v294 = vunpack.c.l.b16 %v186
      %v295 = vunpack.c.l.b16 %v187
      %v296 = vunpack.c.l.b16 %v188
      %v297 = vunpack.c.l.b16 %v189
      %v298 = vunpack.c.l.b16 %v190
      %v299 = vunpack.c.l.b16 %v191
      %v300 = vunpack.c.l.b16 %v192
      %v301 = vunpack.c.l.b16 %v193
      %v302 = vunpack.c.l.b16 %v194
      %v303 = vunpack.c.l.b16 %v195
      %v304 = vunpack.c.l.b16 %v196
      %v305 = vunpack.c.l.b16 %v197
      %v306 = vunpack.c.l.b16 %v198
      %v307 = vunpack.c.l.b16 %v199
      %v308 = vunpack.c.l.b16 %v200
      %v309 = vunpack.c.l.b16 %v201
      %v310 = vunpack.c.l.b16 %v202
      %v311 = vunpack.c.l.b16 %v203
      %v312 = vunpack.c.l.b16 %v204
      %v313 = vunpack.c.l.b16 %v205
      %v314 = vunpack.c.l.b16 %v206
      %v315 = vunpack.c.l.b16 %v207
      %v316 = vunpack.c.l.b16 %v208
      %v317 = vunpack.c.l.b16 %v209
      %v318 = vunpack.c.l.b16 %v210
      %v319 = vunpack.c.l.b16 %v211
      %v320 = vunpack.c.l.b16 %v212
      %v321 = vunpack.c.l.b16 %v213
      %v322 = vunpack.c.l.b16 %v214
      %v323 = vunpack.c.l.b16 %v215
      %v324 = vunpack.c.l.b16 %v216
      %v325 = vpack.c.b16 %v294, %v293
      %v326 = vpack.c.b16 %v296, %v295
      %v327 = vpack.c.b16 %v298, %v297
      %v328 = vpack.c.b16 %v300, %v299
      %v329 = vpack.c.b16 %v302, %v301
      %v330 = vpack.c.b16 %v304, %v303
      %v331 = vpack.c.b16 %v306, %v305
      %v332 = vpack.c.b16 %v308, %v307
      %v333 = vpack.c.b16 %v310, %v309
      %v334 = vpack.c.b16 %v312, %v311
      %v335 = vpack.c.b16 %v314, %v313
      %v336 = vpack.c.b16 %v316, %v315
      %v337 = vpack.c.b16 %v318, %v317
      %v338 = vpack.c.b16 %v320, %v319
      %v339 = vpack.c.b16 %v322, %v321
      %v340 = vpack.c.b16 %v324, %v323
      %357 = vmatpush.bf16.msra.mxu0 %v332
      %358 = vmatpush.bf16.msra.mxu0 %v331
      %359 = vmatpush.bf16.msra.mxu0 %v330
      %360 = vmatpush.bf16.msra.mxu0 %v329
      %361 = vmatpush.bf16.msra.mxu0 %v328
      %362 = vmatpush.bf16.msra.mxu0 %v327
      %363 = vmatpush.bf16.msra.mxu0 %v326
      %364 = vmatpush.bf16.msra.mxu0 %v325
      %365 = vmatmul.bf16.gmra.mxu0 %v245
      %v366 = vpop.f32.mrf.mxu0
      %v367 = vadd.f32 %v219, %v366
      %v368 = vpop.f32.mrf.mxu0
      %v369 = vadd.f32 %v219, %v368
      %370 = vmatmul.bf16.gmra.mxu0 %v247
      %v371 = vpop.f32.mrf.mxu0
      %v372 = vadd.f32 %v219, %v371
      %v373 = vpop.f32.mrf.mxu0
      %v374 = vadd.f32 %v219, %v373
      %375 = vmatmul.bf16.gmra.mxu0 %v249
      %v376 = vpop.f32.mrf.mxu0
      %v377 = vadd.f32 %v219, %v376
      %v378 = vpop.f32.mrf.mxu0
      %v379 = vadd.f32 %v219, %v378
      %380 = vmatmul.bf16.gmra.mxu0 %v251
      %v381 = vpop.f32.mrf.mxu0
      %v382 = vadd.f32 %v219, %v381
      %v383 = vpop.f32.mrf.mxu0
      %v384 = vadd.f32 %v219, %v383
      %385 = vdwg.mxu0
      %386 = vmatpush.bf16.msra.mxu0 %v340
      %387 = vmatpush.bf16.msra.mxu0 %v339
      %388 = vmatpush.bf16.msra.mxu0 %v338
      %389 = vmatpush.bf16.msra.mxu0 %v337
      %390 = vmatpush.bf16.msra.mxu0 %v336
      %391 = vmatpush.bf16.msra.mxu0 %v335
      %392 = vmatpush.bf16.msra.mxu0 %v334
      %393 = vmatpush.bf16.msra.mxu0 %v333
      %394 = vmatmul.bf16.gmra.mxu0 %v246
      %v395 = vpop.f32.mrf.mxu0
      %v396 = vadd.f32 %v367, %v395
      %v397 = vpop.f32.mrf.mxu0
      %v398 = vadd.f32 %v369, %v397
      %399 = vmatmul.bf16.gmra.mxu0 %v248
      %v400 = vpop.f32.mrf.mxu0
      %v401 = vadd.f32 %v372, %v400
      %v402 = vpop.f32.mrf.mxu0
      %v403 = vadd.f32 %v374, %v402
      %404 = vmatmul.bf16.gmra.mxu0 %v250
      %v405 = vpop.f32.mrf.mxu0
      %v406 = vadd.f32 %v377, %v405
      %v407 = vpop.f32.mrf.mxu0
      %v408 = vadd.f32 %v379, %v407
      %409 = vmatmul.bf16.gmra.mxu0 %v252
      %v410 = vpop.f32.mrf.mxu0
      %v411 = vadd.f32 %v382, %v410
      %v412 = vpop.f32.mrf.mxu0
      %v413 = vadd.f32 %v384, %v412
      %414 = vdwg.mxu0
      %v415 = vmax.f32 %v396, 0.0
      %v416 = vmax.f32 %v398, 0.0
      %v417 = vmax.f32 %v401, 0.0
      %v418 = vmax.f32 %v403, 0.0
      %v419 = vmax.f32 %v406, 0.0
      %v420 = vmax.f32 %v408, 0.0
      %v421 = vmax.f32 %v411, 0.0
      %v422 = vmax.f32 %v413, 0.0
      %v423 = vpack.c.bf16 %v415, %v415
      %v424 = vpack.c.bf16 %v416, %v416
      %v425 = vpack.c.bf16 %v417, %v417
      %v426 = vpack.c.bf16 %v418, %v418
      %v427 = vpack.c.bf16 %v419, %v419
      %v428 = vpack.c.bf16 %v420, %v420
      %v429 = vpack.c.bf16 %v421, %v421
      %v430 = vpack.c.bf16 %v422, %v422
      %431 = vst [vmem:[%s175] sm:$0xf] %v423
      %432 = vst [vmem:[%s175 + $0x4] sm:$0xf] %v424
      %433 = vst [vmem:[%s175 + $0x8] sm:$0xf] %v425
      %434 = vst [vmem:[%s175 + $0xc] sm:$0xf] %v426
      %435 = vst [vmem:[%s175 + $0x10] sm:$0xf] %v427
      %436 = vst [vmem:[%s175 + $0x14] sm:$0xf] %v428
      %437 = vst [vmem:[%s175 + $0x18] sm:$0xf] %v429
      %438 = vst [vmem:[%s175 + $0x1c] sm:$0xf] %v430
      %s439 = smul.u32 8, %s14
      %p440 = scmp.lt.s32.totalorder %s439, 15
      %s441 = scalar_select %p440, %s439, 15
      %s442 = smul.addr %s441, 4
      %s443 = scalar_lea.vmem %s3, %s442
      // Predicated region
      $region33: #{clip_fe_forward.8} parent=31 // pred_check
        %p444 = pneg %p100
      $region34: #{clip_fe_forward.8} parent=31 // pred_check_branch
        %446 = sbr.rel (%p444) target = $region36
      $region35: #{clip_fe_forward.8} parent=31 // pred_region
        %s447 = smul.u32 8, %s14
      $region36: #{clip_fe_forward.8} parent=31 // pred_fallthru
        _
    $region32: #{clip_fe_forward.8} parent=5 // pred_fallthru
      _
    %p448 = scmp.le.s32.totalorder 2, %s9
    // Predicated region
    $region37: #{clip_fe_forward.8} parent=5 // pred_check
      %p449 = pneg %p448
    $region38: #{clip_fe_forward.8} parent=5 // pred_check_branch
      %451 = sbr.rel (%p449) target = $region40
    $region39: #{clip_fe_forward.8} parent=5 // pred_region
      %s452 = ssub.s32 %s9, 2
      // Predicated region
      $region41: #{clip_fe_forward.8} parent=39 // pred_check
        %p453 = pneg %p106
      $region42: #{clip_fe_forward.8} parent=39 // pred_check_branch
        %455 = sbr.rel (%p453) target = $region44
      $region43: #{clip_fe_forward.8} parent=39 // pred_region
        %s456 = smul.u32 8, %s15
        %p457 = scmp.lt.s32.totalorder %s456, 15
        %s458 = scalar_select %p457, %s456, 15
        %s459 = smul.addr %s458, 4
        %s460 = scalar_lea.vmem %s3, %s459
      $region44: #{clip_fe_forward.8} parent=39 // pred_fallthru
        _
    $region40: #{clip_fe_forward.8} parent=5 // pred_fallthru
      _
  $region6: #{clip_fe_forward.8} parent=0 // loop_footer
    %s13 = sadd.s32 1, %s9
  $region7: #{clip_fe_forward.8} parent=0 // loop_footer_branch
    %8 = sbr.rel target = $region3
  $region8: #{clip_fe_forward.8} parent=0 // loop_exit
    _

// kernel: clip_fe_forward.9
$region0: #{clip_fe_forward.9}
  #allocation0 [shape = 'u32[]', space=smem, size = 0x4, offset = 0x4, fixed_abs, tag = 'smem constant byte address 0x4 - core index']
  #allocation1 [shape = 'u32[72,128]{1,0:T(1,128)}', space=vmem, size = 0x9000, scoped, tag = 'internal scratch']
  %s0 = inlined_call_operand.vmem [shape: bf16[9,8,128], index: 0, kind: input, shape index: {}]
  %s1 = inlined_call_operand.vmem [shape: bf16[8,128], index: 1, kind: output, shape index: {}]
  %s2 = sld [smem:[#allocation0]]
  $region14: #{clip_fe_forward.9} parent=0
    _
  %s4 = ssub.s32 1, %s2
  %s5 = scalar_select 0, %s4, %s2
  // Predicated region
  $region2: #{clip_fe_forward.9} parent=0 // pred_check
    _
  $region3: #{clip_fe_forward.9} parent=0 // pred_check_branch
    %7 = sbr.rel (0) target = $region5
  $region4: #{clip_fe_forward.9} parent=0 // pred_region
    _
  $region5: #{clip_fe_forward.9} parent=0 // pred_fallthru
    _
  %v8 = vld [vmem:[%s0] sm:$0xf]
  %s9 = scalar_lea.vmem %s0, 4
  %v10 = vld [vmem:[%s9] sm:$0xf]
  %v11 = vunpack.c.l.bf16 %v8
  %v12 = vunpack.c.l.bf16 %v10
  %v13 = vmax.f32 %v11, %v12
  %v14 = vpack.c.bf16 %v13, %v13
  %s15 = scalar_lea.vmem %s0, 8
  %v16 = vld [vmem:[%s15] sm:$0xf]
  %v17 = vunpack.c.l.bf16 %v14
  %v18 = vunpack.c.l.bf16 %v16
  %v19 = vmax.f32 %v17, %v18
  %v20 = vpack.c.bf16 %v19, %v19
  %s21 = scalar_lea.vmem %s0, 12
  %v22 = vld [vmem:[%s21] sm:$0xf]
  %v23 = vunpack.c.l.bf16 %v20
  %v24 = vunpack.c.l.bf16 %v22
  %v25 = vmax.f32 %v23, %v24
  %v26 = vpack.c.bf16 %v25, %v25
  %s27 = scalar_lea.vmem %s0, 16
  %v28 = vld [vmem:[%s27] sm:$0xf]
  %v29 = vunpack.c.l.bf16 %v26
  %v30 = vunpack.c.l.bf16 %v28
  %v31 = vmax.f32 %v29, %v30
  %v32 = vpack.c.bf16 %v31, %v31
  %s33 = scalar_lea.vmem %s0, 20
  %v34 = vld [vmem:[%s33] sm:$0xf]
  %v35 = vunpack.c.l.bf16 %v32
  %v36 = vunpack.c.l.bf16 %v34
  %v37 = vmax.f32 %v35, %v36
  %v38 = vpack.c.bf16 %v37, %v37
  %s39 = scalar_lea.vmem %s0, 24
  %v40 = vld [vmem:[%s39] sm:$0xf]
  %v41 = vunpack.c.l.bf16 %v38
  %v42 = vunpack.c.l.bf16 %v40
  %v43 = vmax.f32 %v41, %v42
  %v44 = vpack.c.bf16 %v43, %v43
  %s45 = scalar_lea.vmem %s0, 28
  %v46 = vld [vmem:[%s45] sm:$0xf]
  %v47 = vunpack.c.l.bf16 %v44
  %v48 = vunpack.c.l.bf16 %v46
  %v49 = vmax.f32 %v47, %v48
  %v50 = vpack.c.bf16 %v49, %v49
  %s51 = scalar_lea.vmem %s0, 32
  %v52 = vld [vmem:[%s51] sm:$0xf]
  %v53 = vunpack.c.l.bf16 %v50
  %v54 = vunpack.c.l.bf16 %v52
  %v55 = vmax.f32 %v53, %v54
  %v56 = vpack.c.bf16 %v55, %v55
  %57 = vst [vmem:[%s1] sm:$0xf] %v56
  // Predicated region
  $region6: #{clip_fe_forward.9} parent=0 // pred_check
    _
  $region7: #{clip_fe_forward.9} parent=0 // pred_check_branch
    %59 = sbr.rel (0) target = $region9
  $region8: #{clip_fe_forward.9} parent=0 // pred_region
    _
  $region9: #{clip_fe_forward.9} parent=0 // pred_fallthru
    _
  // Predicated region
  $region10: #{clip_fe_forward.9} parent=0 // pred_check
    _
  $region11: #{clip_fe_forward.9} parent=0 // pred_check_branch
    %61 = sbr.rel (0) target = $region13
  $region12: #{clip_fe_forward.9} parent=0 // pred_region
    _
  $region13: #{clip_fe_forward.9} parent=0 // pred_fallthru
    _

// kernel: clip_fe_forward.11
$region0: #{clip_fe_forward.11}
  #allocation0 [shape = 'u32[]', space=smem, size = 0x4, offset = 0x4, fixed_abs, tag = 'smem constant byte address 0x4 - core index']
  #allocation1 [shape = 'u32[72,128]{1,0:T(1,128)}', space=vmem, size = 0x9000, scoped, tag = 'internal scratch']
  %s0 = inlined_call_operand.vmem [shape: bf16[32,256], index: 0, kind: input, shape index: {}]
  %s1 = inlined_call_operand.vmem [shape: bf16[256,128], index: 1, kind: input, shape index: {}]
  %s2 = inlined_call_operand.vmem [shape: f32[1,128], index: 2, kind: input, shape index: {}]
  %s3 = inlined_call_operand.vmem [shape: bf16[32,128], index: 3, kind: input, shape index: {}]
  %s4 = inlined_call_operand.vmem [shape: bf16[32,128], index: 4, kind: output, shape index: {}]
  %s5 = sld [smem:[#allocation0]]
  $region49: #{clip_fe_forward.11} parent=0
    _
  %s7 = ssub.s32 1, %s5
  %s8 = scalar_select 0, %s7, %s5
  loop: start=0, step=1, limit=4
  $region2: #{clip_fe_forward.11} parent=0 // loop_pre_header
    _
  $region3: #{clip_fe_forward.11} parent=0 // loop_header
    %s10 = sphi 0, %s14
    %p11 = scmp.ge.s32.totalorder %s10, 4
    %s20 = sphi 0, %s22
    %s23 = sphi 0, %s20
    %s24 = sphi 0, %s23
    %s40 = sphi 0, %s24
    %s44 = sphi 0, %s44
    %s46 = sphi 0, %s44
    %s47 = sphi 0, %s46
    %s61 = sphi 0, %s47
    %s65 = sphi 0, %s65
    %s67 = sphi 0, %s65
    %s68 = sphi 0, %s67
    %s82 = sphi 0, %s68
    %s88 = sphi 0, %s90
    %s91 = sphi 0, %s88
    %s92 = sphi 0, %s91
    %s108 = sphi 0, %s92
    %s114 = sphi 0, %s116
    %s117 = sphi 0, %s114
    %s118 = sphi 0, %s117
    %s134 = sphi 0, %s118
  $region4: #{clip_fe_forward.11} parent=0 // loop_header_branch
    %13 = sbr.rel (%p11) target = $region8
  $region5: #{clip_fe_forward.11} parent=0 // loop_body
    %s15 = ssub.s32 %s10, 1
    %s16 = ssub.s32 %s10, 2
    %s17 = sadd.s32 %s10, 1
    %s18 = ssub.s32 %s10, %s17
    %p19 = scmp.eq.s32.totalorder %s18, 0
    %s21 = sadd.s32 %s20, 1
    %s22 = scalar_select %p19, %s20, %s21
    %p25 = pneg %p19
    %p26 = scmp.eq.s32.totalorder %s10, 1
    %p27 = por %p25, %p26
    %p28 = scmp.ne.s32.totalorder %s20, %s23
    %p29 = scmp.eq.s32.totalorder %s10, 0
    %p30 = por %p28, %p29
    %p31 = scmp.ne.s32.totalorder %s20, %s23
    %p32 = scmp.eq.s32.totalorder %s15, 1
    %p33 = por %p31, %p32
    %p34 = scmp.ne.s32.totalorder %s23, %s24
    %p35 = scmp.eq.s32.totalorder %s15, 0
    %p36 = por %p34, %p35
    %p37 = scmp.ne.s32.totalorder %s23, %s24
    %p38 = scmp.eq.s32.totalorder %s16, 1
    %p39 = por %p37, %p38
    %p41 = scmp.ne.s32.totalorder %s24, %s40
    %p42 = scmp.eq.s32.totalorder %s16, 0
    %p43 = por %p41, %p42
    %s45 = sadd.s32 %s44, 1
    %p48 = scmp.eq.s32.totalorder %s10, 1
    %p49 = scmp.ne.s32.totalorder %s44, %s46
    %p50 = scmp.eq.s32.totalorder %s10, 0
    %p51 = por %p49, %p50
    %p52 = scmp.ne.s32.totalorder %s44, %s46
    %p53 = scmp.eq.s32.totalorder %s15, 1
    %p54 = por %p52, %p53
    %p55 = scmp.ne.s32.totalorder %s46, %s47
    %p56 = scmp.eq.s32.totalorder %s15, 0
    %p57 = por %p55, %p56
    %p58 = scmp.ne.s32.totalorder %s46, %s47
    %p59 = scmp.eq.s32.totalorder %s16, 1
    %p60 = por %p58, %p59
    %p62 = scmp.ne.s32.totalorder %s47, %s61
    %p63 = scmp.eq.s32.totalorder %s16, 0
    %p64 = por %p62, %p63
    %s66 = sadd.s32 %s65, 1
    %p69 = scmp.eq.s32.totalorder %s10, 1
    %p70 = scmp.ne.s32.totalorder %s65, %s67
    %p71 = scmp.eq.s32.totalorder %s10, 0
    %p72 = por %p70, %p71
    %p73 = scmp.ne.s32.totalorder %s65, %s67
    %p74 = scmp.eq.s32.totalorder %s15, 1
    %p75 = por %p73, %p74
    %p76 = scmp.ne.s32.totalorder %s67, %s68
    %p77 = scmp.eq.s32.totalorder %s15, 0
    %p78 = por %p76, %p77
    %p79 = scmp.ne.s32.totalorder %s67, %s68
    %p80 = scmp.eq.s32.totalorder %s16, 1
    %p81 = por %p79, %p80
    %p83 = scmp.ne.s32.totalorder %s68, %s82
    %p84 = scmp.eq.s32.totalorder %s16, 0
    %p85 = por %p83, %p84
    %s86 = ssub.s32 %s10, %s17
    %p87 = scmp.eq.s32.totalorder %s86, 0
    %s89 = sadd.s32 %s88, 1
    %s90 = scalar_select %p87, %s88, %s89
    %p93 = pneg %p87
    %p94 = scmp.eq.s32.totalorder %s10, 1
    %p95 = por %p93, %p94
    %p96 = scmp.ne.s32.totalorder %s88, %s91
    %p97 = scmp.eq.s32.totalorder %s10, 0
    %p98 = por %p96, %p97
    %p99 = scmp.ne.s32.totalorder %s88, %s91
    %p100 = scmp.eq.s32.totalorder %s15, 1
    %p101 = por %p99, %p100
    %p102 = scmp.ne.s32.totalorder %s91, %s92
    %p103 = scmp.eq.s32.totalorder %s15, 0
    %p104 = por %p102, %p103
    %p105 = scmp.ne.s32.totalorder %s91, %s92
    %p106 = scmp.eq.s32.totalorder %s16, 1
    %p107 = por %p105, %p106
    %p109 = scmp.ne.s32.totalorder %s92, %s108
    %p110 = scmp.eq.s32.totalorder %s16, 0
    %p111 = por %p109, %p110
    %s112 = ssub.s32 %s10, %s17
    %p113 = scmp.eq.s32.totalorder %s112, 0
    %s115 = sadd.s32 %s114, 1
    %s116 = scalar_select %p113, %s114, %s115
    %p119 = pneg %p113
    %p120 = scmp.eq.s32.totalorder %s10, 1
    %p121 = por %p119, %p120
    %p122 = scmp.ne.s32.totalorder %s114, %s117
    %p123 = scmp.eq.s32.totalorder %s10, 0
    %p124 = por %p122, %p123
    %p125 = scmp.ne.s32.totalorder %s114, %s117
    %p126 = scmp.eq.s32.totalorder %s15, 1
    %p127 = por %p125, %p126
    %p128 = scmp.ne.s32.totalorder %s117, %s118
    %p129 = scmp.eq.s32.totalorder %s15, 0
    %p130 = por %p128, %p129
    %p131 = scmp.ne.s32.totalorder %s117, %s118
    %p132 = scmp.eq.s32.totalorder %s16, 1
    %p133 = por %p131, %p132
    %p135 = scmp.ne.s32.totalorder %s118, %s134
    %p136 = scmp.eq.s32.totalorder %s16, 0
    %p137 = por %p135, %p136
    %p138 = scmp.le.s32.totalorder 1, %s10
    %p139 = scmp.lt.s32.totalorder %s10, 3
    %p140 = pnand %p138, %p139
    %p141 = pneg %p140
    // Predicated region
    $region9: #{clip_fe_forward.11} parent=5 // pred_check
      _
    $region10: #{clip_fe_forward.11} parent=5 // pred_check_branch
      %143 = sbr.rel (%p140) target = $region12
    $region11: #{clip_fe_forward.11} parent=5 // pred_region
      %s144 = ssub.s32 %s10, 1
      // Predicated region
      $region13: #{clip_fe_forward.11} parent=11 // pred_check
        %p145 = pneg %p57
      $region14: #{clip_fe_forward.11} parent=11 // pred_check_branch
        %147 = sbr.rel (%p145) target = $region16
      $region15: #{clip_fe_forward.11} parent=11 // pred_region
        _
      $region16: #{clip_fe_forward.11} parent=11 // pred_fallthru
        _
      // Predicated region
      $region17: #{clip_fe_forward.11} parent=11 // pred_check
        %p148 = pneg %p78
      $region18: #{clip_fe_forward.11} parent=11 // pred_check_branch
        %150 = sbr.rel (%p148) target = $region20
      $region19: #{clip_fe_forward.11} parent=11 // pred_region
        _
      $region20: #{clip_fe_forward.11} parent=11 // pred_fallthru
        _
    $region12: #{clip_fe_forward.11} parent=5 // pred_fallthru
      _
    %p151 = scmp.lt.s32.totalorder %s10, 2
    // Predicated region
    $region21: #{clip_fe_forward.11} parent=5 // pred_check
      %p152 = pneg %p151
    $region22: #{clip_fe_forward.11} parent=5 // pred_check_branch
      %154 = sbr.rel (%p152) target = $region24
    $region23: #{clip_fe_forward.11} parent=5 // pred_region
      // Predicated region
      $region25: #{clip_fe_forward.11} parent=23 // pred_check
        %p155 = pneg %p30
      $region26: #{clip_fe_forward.11} parent=23 // pred_check_branch
        %157 = sbr.rel (%p155) target = $region28
      $region27: #{clip_fe_forward.11} parent=23 // pred_region
        %s158 = smul.u32 2, %s10
        %p159 = scmp.lt.s32.totalorder %s158, 3
        %s160 = scalar_select %p159, %s158, 3
        %s161 = smul.addr %s160, 2
        %s162 = smul.addr %s161, 4
        %s163 = scalar_lea.vmem %s0, %s162
        %s164 = smul.u32 2, %s10
      $region28: #{clip_fe_forward.11} parent=23 // pred_fallthru
        _
      // Predicated region
      $region29: #{clip_fe_forward.11} parent=23 // pred_check
        %p165 = pneg %p98
      $region30: #{clip_fe_forward.11} parent=23 // pred_check_branch
        %167 = sbr.rel (%p165) target = $region32
      $region31: #{clip_fe_forward.11} parent=23 // pred_region
        %s168 = smul.u32 2, %s10
        %p169 = scmp.lt.s32.totalorder %s168, 3
        %s170 = scalar_select %p169, %s168, 3
        %s171 = smul.addr %s170, 4
        %s172 = scalar_lea.vmem %s3, %s171
        %s173 = smul.u32 2, %s10
      $region32: #{clip_fe_forward.11} parent=23 // pred_fallthru
        _
    $region24: #{clip_fe_forward.11} parent=5 // pred_fallthru
      _
    %p174 = scmp.le.s32.totalorder 1, %s10
    %p175 = scmp.lt.s32.totalorder %s10, 3
    %p176 = pnand %p174, %p175
    %p177 = pneg %p176
    // Predicated region
    $region33: #{clip_fe_forward.11} parent=5 // pred_check
      _
    $region34: #{clip_fe_forward.11} parent=5 // pred_check_branch
      %179 = sbr.rel (%p176) target = $region36
    $region35: #{clip_fe_forward.11} parent=5 // pred_region
      %s180 = ssub.s32 %s10, 1
      %s181 = smul.u32 2, %s15
      %p182 = scmp.lt.s32.totalorder %s181, 3
      %s183 = scalar_select %p182, %s181, 3
      %s184 = smul.addr %s183, 2
      %s185 = smul.addr %s184, 4
      %s186 = scalar_lea.vmem %s0, %s185
      %p187 = pneg %p36
      %p188 = pneg %p33
      %p189 = pneg %p57
      %p190 = pneg %p54
      %p191 = pneg %p78
      %p192 = pneg %p75
      %s193 = smul.u32 2, %s15
      %p194 = scmp.lt.s32.totalorder %s193, 3
      %s195 = scalar_select %p194, %s193, 3
      %s196 = smul.addr %s195, 4
      %s197 = scalar_lea.vmem %s3, %s196
      %p198 = pneg %p104
      %p199 = pneg %p101
      %p200 = pneg %p130
      %p201 = pneg %p127
      %s202 = smul.u32 2, %s15
      %p203 = scmp.lt.s32.totalorder %s202, 3
      %s204 = scalar_select %p203, %s202, 3
      %s205 = smul.addr %s204, 4
      %s206 = scalar_lea.vmem %s4, %s205
      %s207 = smul.u32 2, %s15
      %p208 = scmp.lt.s32.totalorder %s207, 3
      %s209 = scalar_select %p208, %s207, 3
      %s210 = smul.addr %s209, 2
      %s211 = smul.addr %s210, 4
      %s212 = scalar_lea.vmem %s0, %s211
      %s213 = smul.u32 2, %s15
      %s214 = smul.u32 2, %s15
      %p215 = scmp.lt.s32.totalorder %s214, 3
      %s216 = scalar_select %p215, %s214, 3
      %s217 = smul.addr %s216, 4
      %s218 = scalar_lea.vmem %s3, %s217
      %s219 = smul.u32 2, %s15
      %s220 = smul.u32 2, %s15
      %p221 = scmp.lt.s32.totalorder %s220, 3
      %s222 = scalar_select %p221, %s220, 3
      %s223 = smul.addr %s222, 4
      %s224 = scalar_lea.vmem %s4, %s223
      %s225 = smul.u32 2, %s15
      %v226 = vld [vmem:[%s212] sm:$0xff]
      %v227 = vld [vmem:[%s212 + $0x8] sm:$0xff]
      %v228 = vld [vmem:[%s1] sm:$0xf]
      %v229 = vld [vmem:[%s1 + $0x4] sm:$0xf]
      %v230 = vld [vmem:[%s1 + $0x8] sm:$0xf]
      %v231 = vld [vmem:[%s1 + $0xc] sm:$0xf]
      %v232 = vld [vmem:[%s1 + $0x10] sm:$0xf]
      %v233 = vld [vmem:[%s1 + $0x14] sm:$0xf]
      %v234 = vld [vmem:[%s1 + $0x18] sm:$0xf]
      %v235 = vld [vmem:[%s1 + $0x1c] sm:$0xf]
      %v236 = vld [vmem:[%s1 + $0x20] sm:$0xf]
      %v237 = vld [vmem:[%s1 + $0x24] sm:$0xf]
      %v238 = vld [vmem:[%s1 + $0x28] sm:$0xf]
      %v239 = vld [vmem:[%s1 + $0x2c] sm:$0xf]
      %v240 = vld [vmem:[%s1 + $0x30] sm:$0xf]
      %v241 = vld [vmem:[%s1 + $0x34] sm:$0xf]
      %v242 = vld [vmem:[%s1 + $0x38] sm:$0xf]
      %v243 = vld [vmem:[%s1 + $0x3c] sm:$0xf]
      %v244 = vld [vmem:[%s1 + $0x40] sm:$0xf]
      %v245 = vld [vmem:[%s1 + $0x44] sm:$0xf]
      %v246 = vld [vmem:[%s1 + $0x48] sm:$0xf]
      %v247 = vld [vmem:[%s1 + $0x4c] sm:$0xf]
      %v248 = vld [vmem:[%s1 + $0x50] sm:$0xf]
      %v249 = vld [vmem:[%s1 + $0x54] sm:$0xf]
      %v250 = vld [vmem:[%s1 + $0x58] sm:$0xf]
      %v251 = vld [vmem:[%s1 + $0x5c] sm:$0xf]
      %v252 = vld [vmem:[%s1 + $0x60] sm:$0xf]
      %v253 = vld [vmem:[%s1 + $0x64] sm:$0xf]
      %v254 = vld [vmem:[%s1 + $0x68] sm:$0xf]
      %v255 = vld [vmem:[%s1 + $0x6c] sm:$0xf]
      %v256 = vld [vmem:[%s1 + $0x70] sm:$0xf]
      %v257 = vld [vmem:[%s1 + $0x74] sm:$0xf]
      %v258 = vld [vmem:[%s1 + $0x78] sm:$0xf]
      %v259 = vld [vmem:[%s1 + $0x7c] sm:$0xf]
      %v260 = vld [vmem:[%s2] sm:$0x1]
      %v262 = vperm.slane %v260, 0
      %v266 = vunpack.c.l.b16 %v226
      %v267 = vunpack.c.h.b16 %v226
      %v268 = vunpack.c.l.b16 %v227
      %v269 = vunpack.c.h.b16 %v227
      %v270 = vpack.c.b16 %v268, %v266
      %v271 = vpack.c.b16 %v269, %v267
      %v306 = vunpack.c.l.b16 %v228
      %v307 = vunpack.c.l.b16 %v229
      %v308 = vunpack.c.l.b16 %v230
      %v309 = vunpack.c.l.b16 %v231
      %v310 = vunpack.c.l.b16 %v232
      %v311 = vunpack.c.l.b16 %v233
      %v312 = vunpack.c.l.b16 %v234
      %v313 = vunpack.c.l.b16 %v235
      %v314 = vunpack.c.l.b16 %v236
      %v315 = vunpack.c.l.b16 %v237
      %v316 = vunpack.c.l.b16 %v238
      %v317 = vunpack.c.l.b16 %v239
      %v318 = vunpack.c.l.b16 %v240
      %v319 = vunpack.c.l.b16 %v241
      %v320 = vunpack.c.l.b16 %v242
      %v321 = vunpack.c.l.b16 %v243
      %v322 = vunpack.c.l.b16 %v244
      %v323 = vunpack.c.l.b16 %v245
      %v324 = vunpack.c.l.b16 %v246
      %v325 = vunpack.c.l.b16 %v247
      %v326 = vunpack.c.l.b16 %v248
      %v327 = vunpack.c.l.b16 %v249
      %v328 = vunpack.c.l.b16 %v250
      %v329 = vunpack.c.l.b16 %v251
      %v330 = vunpack.c.l.b16 %v252
      %v331 = vunpack.c.l.b16 %v253
      %v332 = vunpack.c.l.b16 %v254
      %v333 = vunpack.c.l.b16 %v255
      %v334 = vunpack.c.l.b16 %v256
      %v335 = vunpack.c.l.b16 %v257
      %v336 = vunpack.c.l.b16 %v258
      %v337 = vunpack.c.l.b16 %v259
      %v338 = vpack.c.b16 %v307, %v306
      %v339 = vpack.c.b16 %v309, %v308
      %v340 = vpack.c.b16 %v311, %v310
      %v341 = vpack.c.b16 %v313, %v312
      %v342 = vpack.c.b16 %v315, %v314
      %v343 = vpack.c.b16 %v317, %v316
      %v344 = vpack.c.b16 %v319, %v318
      %v345 = vpack.c.b16 %v321, %v320
      %v346 = vpack.c.b16 %v323, %v322
      %v347 = vpack.c.b16 %v325, %v324
      %v348 = vpack.c.b16 %v327, %v326
      %v349 = vpack.c.b16 %v329, %v328
      %v350 = vpack.c.b16 %v331, %v330
      %v351 = vpack.c.b16 %v333, %v332
      %v352 = vpack.c.b16 %v335, %v334
      %v353 = vpack.c.b16 %v337, %v336
      %370 = vmatpush.bf16.msra.mxu0 %v345
      %371 = vmatpush.bf16.msra.mxu0 %v344
      %372 = vmatpush.bf16.msra.mxu0 %v343
      %373 = vmatpush.bf16.msra.mxu0 %v342
      %374 = vmatpush.bf16.msra.mxu0 %v341
      %375 = vmatpush.bf16.msra.mxu0 %v340
      %376 = vmatpush.bf16.msra.mxu0 %v339
      %377 = vmatpush.bf16.msra.mxu0 %v338
      %378 = vmatmul.bf16.gmra.mxu0 %v270
      %v379 = vpop.f32.mrf.mxu0
      %v380 = vadd.f32 %v262, %v379
      %v381 = vpop.f32.mrf.mxu0
      %v382 = vadd.f32 %v262, %v381
      %383 = vdwg.mxu0
      %384 = vmatpush.bf16.msra.mxu0 %v353
      %385 = vmatpush.bf16.msra.mxu0 %v352
      %386 = vmatpush.bf16.msra.mxu0 %v351
      %387 = vmatpush.bf16.msra.mxu0 %v350
      %388 = vmatpush.bf16.msra.mxu0 %v349
      %389 = vmatpush.bf16.msra.mxu0 %v348
      %390 = vmatpush.bf16.msra.mxu0 %v347
      %391 = vmatpush.bf16.msra.mxu0 %v346
      %392 = vmatmul.bf16.gmra.mxu0 %v271
      %v393 = vpop.f32.mrf.mxu0
      %v394 = vadd.f32 %v380, %v393
      %v395 = vpop.f32.mrf.mxu0
      %v396 = vadd.f32 %v382, %v395
      %397 = vdwg.mxu0
      %v398 = vld [vmem:[%s218] sm:$0xf]
      %v399 = vld [vmem:[%s218 + $0x4] sm:$0xf]
      %v400 = vunpack.c.l.bf16 %v398
      %v401 = vunpack.c.l.bf16 %v399
      %v402 = vadd.f32 %v394, %v400
      %v403 = vadd.f32 %v396, %v401
      %v404 = vmax.f32 %v402, 0.0
      %v405 = vmax.f32 %v403, 0.0
      %v406 = vpack.c.bf16 %v404, %v404
      %v407 = vpack.c.bf16 %v405, %v405
      %408 = vst [vmem:[%s224] sm:$0xf] %v406
      %409 = vst [vmem:[%s224 + $0x4] sm:$0xf] %v407
      %s410 = smul.u32 2, %s15
      %p411 = scmp.lt.s32.totalorder %s410, 3
      %s412 = scalar_select %p411, %s410, 3
      %s413 = smul.addr %s412, 4
      %s414 = scalar_lea.vmem %s4, %s413
      // Predicated region
      $region37: #{clip_fe_forward.11} parent=35 // pred_check
        %p415 = pneg %p127
      $region38: #{clip_fe_forward.11} parent=35 // pred_check_branch
        %417 = sbr.rel (%p415) target = $region40
      $region39: #{clip_fe_forward.11} parent=35 // pred_region
        %s418 = smul.u32 2, %s15
      $region40: #{clip_fe_forward.11} parent=35 // pred_fallthru
        _
    $region36: #{clip_fe_forward.11} parent=5 // pred_fallthru
      _
    %p419 = scmp.le.s32.totalorder 2, %s10
    // Predicated region
    $region41: #{clip_fe_forward.11} parent=5 // pred_check
      %p420 = pneg %p419
    $region42: #{clip_fe_forward.11} parent=5 // pred_check_branch
      %422 = sbr.rel (%p420) target = $region44
    $region43: #{clip_fe_forward.11} parent=5 // pred_region
      %s423 = ssub.s32 %s10, 2
      // Predicated region
      $region45: #{clip_fe_forward.11} parent=43 // pred_check
        %p424 = pneg %p133
      $region46: #{clip_fe_forward.11} parent=43 // pred_check_branch
        %426 = sbr.rel (%p424) target = $region48
      $region47: #{clip_fe_forward.11} parent=43 // pred_region
        %s427 = smul.u32 2, %s16
        %p428 = scmp.lt.s32.totalorder %s427, 3
        %s429 = scalar_select %p428, %s427, 3
        %s430 = smul.addr %s429, 4
        %s431 = scalar_lea.vmem %s4, %s430
      $region48: #{clip_fe_forward.11} parent=43 // pred_fallthru
        _
    $region44: #{clip_fe_forward.11} parent=5 // pred_fallthru
      _
  $region6: #{clip_fe_forward.11} parent=0 // loop_footer
    %s14 = sadd.s32 1, %s10
  $region7: #{clip_fe_forward.11} parent=0 // loop_footer_branch
    %9 = sbr.rel target = $region3
  $region8: #{clip_fe_forward.11} parent=0 // loop_exit
    _

// kernel: clip_fe_forward.10
$region0: #{clip_fe_forward.10}
  #allocation0 [shape = 'u32[]', space=smem, size = 0x4, offset = 0x4, fixed_abs, tag = 'smem constant byte address 0x4 - core index']
  #allocation1 [shape = 'u32[72,128]{1,0:T(1,128)}', space=vmem, size = 0x9000, scoped, tag = 'internal scratch']
  %s0 = inlined_call_operand.vmem [shape: bf16[32,256], index: 0, kind: input, shape index: {}]
  %s1 = inlined_call_operand.vmem [shape: bf16[256,128], index: 1, kind: input, shape index: {}]
  %s2 = inlined_call_operand.vmem [shape: f32[1,128], index: 2, kind: input, shape index: {}]
  %s3 = inlined_call_operand.vmem [shape: bf16[32,128], index: 3, kind: output, shape index: {}]
  %s4 = sld [smem:[#allocation0]]
  $region45: #{clip_fe_forward.10} parent=0
    _
  %s6 = ssub.s32 1, %s4
  %s7 = scalar_select 0, %s6, %s4
  loop: start=0, step=1, limit=4
  $region2: #{clip_fe_forward.10} parent=0 // loop_pre_header
    _
  $region3: #{clip_fe_forward.10} parent=0 // loop_header
    %s9 = sphi 0, %s13
    %p10 = scmp.ge.s32.totalorder %s9, 4
    %s19 = sphi 0, %s21
    %s22 = sphi 0, %s19
    %s23 = sphi 0, %s22
    %s39 = sphi 0, %s23
    %s43 = sphi 0, %s43
    %s45 = sphi 0, %s43
    %s46 = sphi 0, %s45
    %s60 = sphi 0, %s46
    %s64 = sphi 0, %s64
    %s66 = sphi 0, %s64
    %s67 = sphi 0, %s66
    %s81 = sphi 0, %s67
    %s87 = sphi 0, %s89
    %s90 = sphi 0, %s87
    %s91 = sphi 0, %s90
    %s107 = sphi 0, %s91
  $region4: #{clip_fe_forward.10} parent=0 // loop_header_branch
    %12 = sbr.rel (%p10) target = $region8
  $region5: #{clip_fe_forward.10} parent=0 // loop_body
    %s14 = ssub.s32 %s9, 1
    %s15 = ssub.s32 %s9, 2
    %s16 = sadd.s32 %s9, 1
    %s17 = ssub.s32 %s9, %s16
    %p18 = scmp.eq.s32.totalorder %s17, 0
    %s20 = sadd.s32 %s19, 1
    %s21 = scalar_select %p18, %s19, %s20
    %p24 = pneg %p18
    %p25 = scmp.eq.s32.totalorder %s9, 1
    %p26 = por %p24, %p25
    %p27 = scmp.ne.s32.totalorder %s19, %s22
    %p28 = scmp.eq.s32.totalorder %s9, 0
    %p29 = por %p27, %p28
    %p30 = scmp.ne.s32.totalorder %s19, %s22
    %p31 = scmp.eq.s32.totalorder %s14, 1
    %p32 = por %p30, %p31
    %p33 = scmp.ne.s32.totalorder %s22, %s23
    %p34 = scmp.eq.s32.totalorder %s14, 0
    %p35 = por %p33, %p34
    %p36 = scmp.ne.s32.totalorder %s22, %s23
    %p37 = scmp.eq.s32.totalorder %s15, 1
    %p38 = por %p36, %p37
    %p40 = scmp.ne.s32.totalorder %s23, %s39
    %p41 = scmp.eq.s32.totalorder %s15, 0
    %p42 = por %p40, %p41
    %s44 = sadd.s32 %s43, 1
    %p47 = scmp.eq.s32.totalorder %s9, 1
    %p48 = scmp.ne.s32.totalorder %s43, %s45
    %p49 = scmp.eq.s32.totalorder %s9, 0
    %p50 = por %p48, %p49
    %p51 = scmp.ne.s32.totalorder %s43, %s45
    %p52 = scmp.eq.s32.totalorder %s14, 1
    %p53 = por %p51, %p52
    %p54 = scmp.ne.s32.totalorder %s45, %s46
    %p55 = scmp.eq.s32.totalorder %s14, 0
    %p56 = por %p54, %p55
    %p57 = scmp.ne.s32.totalorder %s45, %s46
    %p58 = scmp.eq.s32.totalorder %s15, 1
    %p59 = por %p57, %p58
    %p61 = scmp.ne.s32.totalorder %s46, %s60
    %p62 = scmp.eq.s32.totalorder %s15, 0
    %p63 = por %p61, %p62
    %s65 = sadd.s32 %s64, 1
    %p68 = scmp.eq.s32.totalorder %s9, 1
    %p69 = scmp.ne.s32.totalorder %s64, %s66
    %p70 = scmp.eq.s32.totalorder %s9, 0
    %p71 = por %p69, %p70
    %p72 = scmp.ne.s32.totalorder %s64, %s66
    %p73 = scmp.eq.s32.totalorder %s14, 1
    %p74 = por %p72, %p73
    %p75 = scmp.ne.s32.totalorder %s66, %s67
    %p76 = scmp.eq.s32.totalorder %s14, 0
    %p77 = por %p75, %p76
    %p78 = scmp.ne.s32.totalorder %s66, %s67
    %p79 = scmp.eq.s32.totalorder %s15, 1
    %p80 = por %p78, %p79
    %p82 = scmp.ne.s32.totalorder %s67, %s81
    %p83 = scmp.eq.s32.totalorder %s15, 0
    %p84 = por %p82, %p83
    %s85 = ssub.s32 %s9, %s16
    %p86 = scmp.eq.s32.totalorder %s85, 0
    %s88 = sadd.s32 %s87, 1
    %s89 = scalar_select %p86, %s87, %s88
    %p92 = pneg %p86
    %p93 = scmp.eq.s32.totalorder %s9, 1
    %p94 = por %p92, %p93
    %p95 = scmp.ne.s32.totalorder %s87, %s90
    %p96 = scmp.eq.s32.totalorder %s9, 0
    %p97 = por %p95, %p96
    %p98 = scmp.ne.s32.totalorder %s87, %s90
    %p99 = scmp.eq.s32.totalorder %s14, 1
    %p100 = por %p98, %p99
    %p101 = scmp.ne.s32.totalorder %s90, %s91
    %p102 = scmp.eq.s32.totalorder %s14, 0
    %p103 = por %p101, %p102
    %p104 = scmp.ne.s32.totalorder %s90, %s91
    %p105 = scmp.eq.s32.totalorder %s15, 1
    %p106 = por %p104, %p105
    %p108 = scmp.ne.s32.totalorder %s91, %s107
    %p109 = scmp.eq.s32.totalorder %s15, 0
    %p110 = por %p108, %p109
    %p111 = scmp.le.s32.totalorder 1, %s9
    %p112 = scmp.lt.s32.totalorder %s9, 3
    %p113 = pnand %p111, %p112
    %p114 = pneg %p113
    // Predicated region
    $region9: #{clip_fe_forward.10} parent=5 // pred_check
      _
    $region10: #{clip_fe_forward.10} parent=5 // pred_check_branch
      %116 = sbr.rel (%p113) target = $region12
    $region11: #{clip_fe_forward.10} parent=5 // pred_region
      %s117 = ssub.s32 %s9, 1
      // Predicated region
      $region13: #{clip_fe_forward.10} parent=11 // pred_check
        %p118 = pneg %p56
      $region14: #{clip_fe_forward.10} parent=11 // pred_check_branch
        %120 = sbr.rel (%p118) target = $region16
      $region15: #{clip_fe_forward.10} parent=11 // pred_region
        _
      $region16: #{clip_fe_forward.10} parent=11 // pred_fallthru
        _
      // Predicated region
      $region17: #{clip_fe_forward.10} parent=11 // pred_check
        %p121 = pneg %p77
      $region18: #{clip_fe_forward.10} parent=11 // pred_check_branch
        %123 = sbr.rel (%p121) target = $region20
      $region19: #{clip_fe_forward.10} parent=11 // pred_region
        _
      $region20: #{clip_fe_forward.10} parent=11 // pred_fallthru
        _
    $region12: #{clip_fe_forward.10} parent=5 // pred_fallthru
      _
    %p124 = scmp.lt.s32.totalorder %s9, 2
    // Predicated region
    $region21: #{clip_fe_forward.10} parent=5 // pred_check
      %p125 = pneg %p124
    $region22: #{clip_fe_forward.10} parent=5 // pred_check_branch
      %127 = sbr.rel (%p125) target = $region24
    $region23: #{clip_fe_forward.10} parent=5 // pred_region
      // Predicated region
      $region25: #{clip_fe_forward.10} parent=23 // pred_check
        %p128 = pneg %p29
      $region26: #{clip_fe_forward.10} parent=23 // pred_check_branch
        %130 = sbr.rel (%p128) target = $region28
      $region27: #{clip_fe_forward.10} parent=23 // pred_region
        %s131 = smul.u32 2, %s9
        %p132 = scmp.lt.s32.totalorder %s131, 3
        %s133 = scalar_select %p132, %s131, 3
        %s134 = smul.addr %s133, 2
        %s135 = smul.addr %s134, 4
        %s136 = scalar_lea.vmem %s0, %s135
        %s137 = smul.u32 2, %s9
      $region28: #{clip_fe_forward.10} parent=23 // pred_fallthru
        _
    $region24: #{clip_fe_forward.10} parent=5 // pred_fallthru
      _
    %p138 = scmp.le.s32.totalorder 1, %s9
    %p139 = scmp.lt.s32.totalorder %s9, 3
    %p140 = pnand %p138, %p139
    %p141 = pneg %p140
    // Predicated region
    $region29: #{clip_fe_forward.10} parent=5 // pred_check
      _
    $region30: #{clip_fe_forward.10} parent=5 // pred_check_branch
      %143 = sbr.rel (%p140) target = $region32
    $region31: #{clip_fe_forward.10} parent=5 // pred_region
      %s144 = ssub.s32 %s9, 1
      %s145 = smul.u32 2, %s14
      %p146 = scmp.lt.s32.totalorder %s145, 3
      %s147 = scalar_select %p146, %s145, 3
      %s148 = smul.addr %s147, 2
      %s149 = smul.addr %s148, 4
      %s150 = scalar_lea.vmem %s0, %s149
      %p151 = pneg %p35
      %p152 = pneg %p32
      %p153 = pneg %p56
      %p154 = pneg %p53
      %p155 = pneg %p77
      %p156 = pneg %p74
      %p157 = pneg %p103
      %p158 = pneg %p100
      %s159 = smul.u32 2, %s14
      %p160 = scmp.lt.s32.totalorder %s159, 3
      %s161 = scalar_select %p160, %s159, 3
      %s162 = smul.addr %s161, 4
      %s163 = scalar_lea.vmem %s3, %s162
      %s164 = smul.u32 2, %s14
      %p165 = scmp.lt.s32.totalorder %s164, 3
      %s166 = scalar_select %p165, %s164, 3
      %s167 = smul.addr %s166, 2
      %s168 = smul.addr %s167, 4
      %s169 = scalar_lea.vmem %s0, %s168
      %s170 = smul.u32 2, %s14
      %s171 = smul.u32 2, %s14
      %p172 = scmp.lt.s32.totalorder %s171, 3
      %s173 = scalar_select %p172, %s171, 3
      %s174 = smul.addr %s173, 4
      %s175 = scalar_lea.vmem %s3, %s174
      %s176 = smul.u32 2, %s14
      %v177 = vld [vmem:[%s169] sm:$0xff]
      %v178 = vld [vmem:[%s169 + $0x8] sm:$0xff]
      %v179 = vld [vmem:[%s1] sm:$0xf]
      %v180 = vld [vmem:[%s1 + $0x4] sm:$0xf]
      %v181 = vld [vmem:[%s1 + $0x8] sm:$0xf]
      %v182 = vld [vmem:[%s1 + $0xc] sm:$0xf]
      %v183 = vld [vmem:[%s1 + $0x10] sm:$0xf]
      %v184 = vld [vmem:[%s1 + $0x14] sm:$0xf]
      %v185 = vld [vmem:[%s1 + $0x18] sm:$0xf]
      %v186 = vld [vmem:[%s1 + $0x1c] sm:$0xf]
      %v187 = vld [vmem:[%s1 + $0x20] sm:$0xf]
      %v188 = vld [vmem:[%s1 + $0x24] sm:$0xf]
      %v189 = vld [vmem:[%s1 + $0x28] sm:$0xf]
      %v190 = vld [vmem:[%s1 + $0x2c] sm:$0xf]
      %v191 = vld [vmem:[%s1 + $0x30] sm:$0xf]
      %v192 = vld [vmem:[%s1 + $0x34] sm:$0xf]
      %v193 = vld [vmem:[%s1 + $0x38] sm:$0xf]
      %v194 = vld [vmem:[%s1 + $0x3c] sm:$0xf]
      %v195 = vld [vmem:[%s1 + $0x40] sm:$0xf]
      %v196 = vld [vmem:[%s1 + $0x44] sm:$0xf]
      %v197 = vld [vmem:[%s1 + $0x48] sm:$0xf]
      %v198 = vld [vmem:[%s1 + $0x4c] sm:$0xf]
      %v199 = vld [vmem:[%s1 + $0x50] sm:$0xf]
      %v200 = vld [vmem:[%s1 + $0x54] sm:$0xf]
      %v201 = vld [vmem:[%s1 + $0x58] sm:$0xf]
      %v202 = vld [vmem:[%s1 + $0x5c] sm:$0xf]
      %v203 = vld [vmem:[%s1 + $0x60] sm:$0xf]
      %v204 = vld [vmem:[%s1 + $0x64] sm:$0xf]
      %v205 = vld [vmem:[%s1 + $0x68] sm:$0xf]
      %v206 = vld [vmem:[%s1 + $0x6c] sm:$0xf]
      %v207 = vld [vmem:[%s1 + $0x70] sm:$0xf]
      %v208 = vld [vmem:[%s1 + $0x74] sm:$0xf]
      %v209 = vld [vmem:[%s1 + $0x78] sm:$0xf]
      %v210 = vld [vmem:[%s1 + $0x7c] sm:$0xf]
      %v211 = vld [vmem:[%s2] sm:$0x1]
      %v213 = vperm.slane %v211, 0
      %v217 = vunpack.c.l.b16 %v177
      %v218 = vunpack.c.h.b16 %v177
      %v219 = vunpack.c.l.b16 %v178
      %v220 = vunpack.c.h.b16 %v178
      %v221 = vpack.c.b16 %v219, %v217
      %v222 = vpack.c.b16 %v220, %v218
      %v257 = vunpack.c.l.b16 %v179
      %v258 = vunpack.c.l.b16 %v180
      %v259 = vunpack.c.l.b16 %v181
      %v260 = vunpack.c.l.b16 %v182
      %v261 = vunpack.c.l.b16 %v183
      %v262 = vunpack.c.l.b16 %v184
      %v263 = vunpack.c.l.b16 %v185
      %v264 = vunpack.c.l.b16 %v186
      %v265 = vunpack.c.l.b16 %v187
      %v266 = vunpack.c.l.b16 %v188
      %v267 = vunpack.c.l.b16 %v189
      %v268 = vunpack.c.l.b16 %v190
      %v269 = vunpack.c.l.b16 %v191
      %v270 = vunpack.c.l.b16 %v192
      %v271 = vunpack.c.l.b16 %v193
      %v272 = vunpack.c.l.b16 %v194
      %v273 = vunpack.c.l.b16 %v195
      %v274 = vunpack.c.l.b16 %v196
      %v275 = vunpack.c.l.b16 %v197
      %v276 = vunpack.c.l.b16 %v198
      %v277 = vunpack.c.l.b16 %v199
      %v278 = vunpack.c.l.b16 %v200
      %v279 = vunpack.c.l.b16 %v201
      %v280 = vunpack.c.l.b16 %v202
      %v281 = vunpack.c.l.b16 %v203
      %v282 = vunpack.c.l.b16 %v204
      %v283 = vunpack.c.l.b16 %v205
      %v284 = vunpack.c.l.b16 %v206
      %v285 = vunpack.c.l.b16 %v207
      %v286 = vunpack.c.l.b16 %v208
      %v287 = vunpack.c.l.b16 %v209
      %v288 = vunpack.c.l.b16 %v210
      %v289 = vpack.c.b16 %v258, %v257
      %v290 = vpack.c.b16 %v260, %v259
      %v291 = vpack.c.b16 %v262, %v261
      %v292 = vpack.c.b16 %v264, %v263
      %v293 = vpack.c.b16 %v266, %v265
      %v294 = vpack.c.b16 %v268, %v267
      %v295 = vpack.c.b16 %v270, %v269
      %v296 = vpack.c.b16 %v272, %v271
      %v297 = vpack.c.b16 %v274, %v273
      %v298 = vpack.c.b16 %v276, %v275
      %v299 = vpack.c.b16 %v278, %v277
      %v300 = vpack.c.b16 %v280, %v279
      %v301 = vpack.c.b16 %v282, %v281
      %v302 = vpack.c.b16 %v284, %v283
      %v303 = vpack.c.b16 %v286, %v285
      %v304 = vpack.c.b16 %v288, %v287
      %321 = vmatpush.bf16.msra.mxu0 %v296
      %322 = vmatpush.bf16.msra.mxu0 %v295
      %323 = vmatpush.bf16.msra.mxu0 %v294
      %324 = vmatpush.bf16.msra.mxu0 %v293
      %325 = vmatpush.bf16.msra.mxu0 %v292
      %326 = vmatpush.bf16.msra.mxu0 %v291
      %327 = vmatpush.bf16.msra.mxu0 %v290
      %328 = vmatpush.bf16.msra.mxu0 %v289
      %329 = vmatmul.bf16.gmra.mxu0 %v221
      %v330 = vpop.f32.mrf.mxu0
      %v331 = vadd.f32 %v213, %v330
      %v332 = vpop.f32.mrf.mxu0
      %v333 = vadd.f32 %v213, %v332
      %334 = vdwg.mxu0
      %335 = vmatpush.bf16.msra.mxu0 %v304
      %336 = vmatpush.bf16.msra.mxu0 %v303
      %337 = vmatpush.bf16.msra.mxu0 %v302
      %338 = vmatpush.bf16.msra.mxu0 %v301
      %339 = vmatpush.bf16.msra.mxu0 %v300
      %340 = vmatpush.bf16.msra.mxu0 %v299
      %341 = vmatpush.bf16.msra.mxu0 %v298
      %342 = vmatpush.bf16.msra.mxu0 %v297
      %343 = vmatmul.bf16.gmra.mxu0 %v222
      %v344 = vpop.f32.mrf.mxu0
      %v345 = vadd.f32 %v331, %v344
      %v346 = vpop.f32.mrf.mxu0
      %v347 = vadd.f32 %v333, %v346
      %348 = vdwg.mxu0
      %v349 = vmax.f32 %v345, 0.0
      %v350 = vmax.f32 %v347, 0.0
      %v351 = vpack.c.bf16 %v349, %v349
      %v352 = vpack.c.bf16 %v350, %v350
      %353 = vst [vmem:[%s175] sm:$0xf] %v351
      %354 = vst [vmem:[%s175 + $0x4] sm:$0xf] %v352
      %s355 = smul.u32 2, %s14
      %p356 = scmp.lt.s32.totalorder %s355, 3
      %s357 = scalar_select %p356, %s355, 3
      %s358 = smul.addr %s357, 4
      %s359 = scalar_lea.vmem %s3, %s358
      // Predicated region
      $region33: #{clip_fe_forward.10} parent=31 // pred_check
        %p360 = pneg %p100
      $region34: #{clip_fe_forward.10} parent=31 // pred_check_branch
        %362 = sbr.rel (%p360) target = $region36
      $region35: #{clip_fe_forward.10} parent=31 // pred_region
        %s363 = smul.u32 2, %s14
      $region36: #{clip_fe_forward.10} parent=31 // pred_fallthru
        _
    $region32: #{clip_fe_forward.10} parent=5 // pred_fallthru
      _
    %p364 = scmp.le.s32.totalorder 2, %s9
    // Predicated region
    $region37: #{clip_fe_forward.10} parent=5 // pred_check
      %p365 = pneg %p364
    $region38: #{clip_fe_forward.10} parent=5 // pred_check_branch
      %367 = sbr.rel (%p365) target = $region40
    $region39: #{clip_fe_forward.10} parent=5 // pred_region
      %s368 = ssub.s32 %s9, 2
      // Predicated region
      $region41: #{clip_fe_forward.10} parent=39 // pred_check
        %p369 = pneg %p106
      $region42: #{clip_fe_forward.10} parent=39 // pred_check_branch
        %371 = sbr.rel (%p369) target = $region44
      $region43: #{clip_fe_forward.10} parent=39 // pred_region
        %s372 = smul.u32 2, %s15
        %p373 = scmp.lt.s32.totalorder %s372, 3
        %s374 = scalar_select %p373, %s372, 3
        %s375 = smul.addr %s374, 4
        %s376 = scalar_lea.vmem %s3, %s375
      $region44: #{clip_fe_forward.10} parent=39 // pred_fallthru
        _
    $region40: #{clip_fe_forward.10} parent=5 // pred_fallthru
      _
  $region6: #{clip_fe_forward.10} parent=0 // loop_footer
    %s13 = sadd.s32 1, %s9
  $region7: #{clip_fe_forward.10} parent=0 // loop_footer_branch
    %8 = sbr.rel target = $region3
  $region8: #{clip_fe_forward.10} parent=0 // loop_exit
    _

// kernel: clip_fe_forward.13
$region0: #{clip_fe_forward.13}
  #allocation0 [shape = 'u32[]', space=smem, size = 0x4, offset = 0x4, fixed_abs, tag = 'smem constant byte address 0x4 - core index']
  #allocation1 [shape = 'u32[72,128]{1,0:T(1,128)}', space=vmem, size = 0x9000, scoped, tag = 'internal scratch']
  %s0 = inlined_call_operand.vmem [shape: bf16[8,256], index: 0, kind: input, shape index: {}]
  %s1 = inlined_call_operand.vmem [shape: bf16[256,128], index: 1, kind: input, shape index: {}]
  %s2 = inlined_call_operand.vmem [shape: f32[1,128], index: 2, kind: input, shape index: {}]
  %s3 = inlined_call_operand.vmem [shape: bf16[8,128], index: 3, kind: output, shape index: {}]
  %s4 = sld [smem:[#allocation0]]
  $region22: #{clip_fe_forward.13} parent=0
    _
  %s6 = ssub.s32 1, %s4
  %s7 = scalar_select 0, %s6, %s4
  // Predicated region
  $region2: #{clip_fe_forward.13} parent=0 // pred_check
    _
  $region3: #{clip_fe_forward.13} parent=0 // pred_check_branch
    %9 = sbr.rel (0) target = $region5
  $region4: #{clip_fe_forward.13} parent=0 // pred_region
    _
  $region5: #{clip_fe_forward.13} parent=0 // pred_fallthru
    _
  // Predicated region
  $region6: #{clip_fe_forward.13} parent=0 // pred_check
    _
  $region7: #{clip_fe_forward.13} parent=0 // pred_check_branch
    %11 = sbr.rel (0) target = $region9
  $region8: #{clip_fe_forward.13} parent=0 // pred_region
    _
  $region9: #{clip_fe_forward.13} parent=0 // pred_fallthru
    _
  // Predicated region
  $region10: #{clip_fe_forward.13} parent=0 // pred_check
    _
  $region11: #{clip_fe_forward.13} parent=0 // pred_check_branch
    %13 = sbr.rel (0) target = $region13
  $region12: #{clip_fe_forward.13} parent=0 // pred_region
    _
  $region13: #{clip_fe_forward.13} parent=0 // pred_fallthru
    _
  %v14 = vld [vmem:[%s0] sm:$0xff]
  %v15 = vld [vmem:[%s1] sm:$0xf]
  %v16 = vld [vmem:[%s1 + $0x4] sm:$0xf]
  %v17 = vld [vmem:[%s1 + $0x8] sm:$0xf]
  %v18 = vld [vmem:[%s1 + $0xc] sm:$0xf]
  %v19 = vld [vmem:[%s1 + $0x10] sm:$0xf]
  %v20 = vld [vmem:[%s1 + $0x14] sm:$0xf]
  %v21 = vld [vmem:[%s1 + $0x18] sm:$0xf]
  %v22 = vld [vmem:[%s1 + $0x1c] sm:$0xf]
  %v23 = vld [vmem:[%s1 + $0x20] sm:$0xf]
  %v24 = vld [vmem:[%s1 + $0x24] sm:$0xf]
  %v25 = vld [vmem:[%s1 + $0x28] sm:$0xf]
  %v26 = vld [vmem:[%s1 + $0x2c] sm:$0xf]
  %v27 = vld [vmem:[%s1 + $0x30] sm:$0xf]
  %v28 = vld [vmem:[%s1 + $0x34] sm:$0xf]
  %v29 = vld [vmem:[%s1 + $0x38] sm:$0xf]
  %v30 = vld [vmem:[%s1 + $0x3c] sm:$0xf]
  %v31 = vld [vmem:[%s1 + $0x40] sm:$0xf]
  %v32 = vld [vmem:[%s1 + $0x44] sm:$0xf]
  %v33 = vld [vmem:[%s1 + $0x48] sm:$0xf]
  %v34 = vld [vmem:[%s1 + $0x4c] sm:$0xf]
  %v35 = vld [vmem:[%s1 + $0x50] sm:$0xf]
  %v36 = vld [vmem:[%s1 + $0x54] sm:$0xf]
  %v37 = vld [vmem:[%s1 + $0x58] sm:$0xf]
  %v38 = vld [vmem:[%s1 + $0x5c] sm:$0xf]
  %v39 = vld [vmem:[%s1 + $0x60] sm:$0xf]
  %v40 = vld [vmem:[%s1 + $0x64] sm:$0xf]
  %v41 = vld [vmem:[%s1 + $0x68] sm:$0xf]
  %v42 = vld [vmem:[%s1 + $0x6c] sm:$0xf]
  %v43 = vld [vmem:[%s1 + $0x70] sm:$0xf]
  %v44 = vld [vmem:[%s1 + $0x74] sm:$0xf]
  %v45 = vld [vmem:[%s1 + $0x78] sm:$0xf]
  %v46 = vld [vmem:[%s1 + $0x7c] sm:$0xf]
  %v47 = vld [vmem:[%s2] sm:$0x1]
  %v49 = vperm.slane %v47, 0
  %v52 = vunpack.c.l.b16 %v14
  %v53 = vunpack.c.h.b16 %v14
  %v54 = vpack.c.b16 %v52, %v52
  %v55 = vpack.c.b16 %v53, %v53
  %v90 = vunpack.c.l.b16 %v15
  %v91 = vunpack.c.l.b16 %v16
  %v92 = vunpack.c.l.b16 %v17
  %v93 = vunpack.c.l.b16 %v18
  %v94 = vunpack.c.l.b16 %v19
  %v95 = vunpack.c.l.b16 %v20
  %v96 = vunpack.c.l.b16 %v21
  %v97 = vunpack.c.l.b16 %v22
  %v98 = vunpack.c.l.b16 %v23
  %v99 = vunpack.c.l.b16 %v24
  %v100 = vunpack.c.l.b16 %v25
  %v101 = vunpack.c.l.b16 %v26
  %v102 = vunpack.c.l.b16 %v27
  %v103 = vunpack.c.l.b16 %v28
  %v104 = vunpack.c.l.b16 %v29
  %v105 = vunpack.c.l.b16 %v30
  %v106 = vunpack.c.l.b16 %v31
  %v107 = vunpack.c.l.b16 %v32
  %v108 = vunpack.c.l.b16 %v33
  %v109 = vunpack.c.l.b16 %v34
  %v110 = vunpack.c.l.b16 %v35
  %v111 = vunpack.c.l.b16 %v36
  %v112 = vunpack.c.l.b16 %v37
  %v113 = vunpack.c.l.b16 %v38
  %v114 = vunpack.c.l.b16 %v39
  %v115 = vunpack.c.l.b16 %v40
  %v116 = vunpack.c.l.b16 %v41
  %v117 = vunpack.c.l.b16 %v42
  %v118 = vunpack.c.l.b16 %v43
  %v119 = vunpack.c.l.b16 %v44
  %v120 = vunpack.c.l.b16 %v45
  %v121 = vunpack.c.l.b16 %v46
  %v122 = vpack.c.b16 %v91, %v90
  %v123 = vpack.c.b16 %v93, %v92
  %v124 = vpack.c.b16 %v95, %v94
  %v125 = vpack.c.b16 %v97, %v96
  %v126 = vpack.c.b16 %v99, %v98
  %v127 = vpack.c.b16 %v101, %v100
  %v128 = vpack.c.b16 %v103, %v102
  %v129 = vpack.c.b16 %v105, %v104
  %v130 = vpack.c.b16 %v107, %v106
  %v131 = vpack.c.b16 %v109, %v108
  %v132 = vpack.c.b16 %v111, %v110
  %v133 = vpack.c.b16 %v113, %v112
  %v134 = vpack.c.b16 %v115, %v114
  %v135 = vpack.c.b16 %v117, %v116
  %v136 = vpack.c.b16 %v119, %v118
  %v137 = vpack.c.b16 %v121, %v120
  %154 = vmatpush.bf16.msra.mxu0 %v129
  %155 = vmatpush.bf16.msra.mxu0 %v128
  %156 = vmatpush.bf16.msra.mxu0 %v127
  %157 = vmatpush.bf16.msra.mxu0 %v126
  %158 = vmatpush.bf16.msra.mxu0 %v125
  %159 = vmatpush.bf16.msra.mxu0 %v124
  %160 = vmatpush.bf16.msra.mxu0 %v123
  %161 = vmatpush.bf16.msra.mxu0 %v122
  %162 = vmatmul.bf16.gmra.mxu0 %v54
  %v163 = vpop.f32.mrf.mxu0
  %v164 = vadd.f32 %v49, %v163
  %v165 = vpop.f32.mrf.mxu0
  %166 = vdwg.mxu0
  %167 = vmatpush.bf16.msra.mxu0 %v137
  %168 = vmatpush.bf16.msra.mxu0 %v136
  %169 = vmatpush.bf16.msra.mxu0 %v135
  %170 = vmatpush.bf16.msra.mxu0 %v134
  %171 = vmatpush.bf16.msra.mxu0 %v133
  %172 = vmatpush.bf16.msra.mxu0 %v132
  %173 = vmatpush.bf16.msra.mxu0 %v131
  %174 = vmatpush.bf16.msra.mxu0 %v130
  %175 = vmatmul.bf16.gmra.mxu0 %v55
  %v176 = vpop.f32.mrf.mxu0
  %v177 = vadd.f32 %v164, %v176
  %v178 = vpop.f32.mrf.mxu0
  %179 = vdwg.mxu0
  %v180 = vmax.f32 %v177, 0.0
  %v181 = vpack.c.bf16 %v180, %v180
  %182 = vst [vmem:[%s3] sm:$0xf] %v181
  // Predicated region
  $region14: #{clip_fe_forward.13} parent=0 // pred_check
    _
  $region15: #{clip_fe_forward.13} parent=0 // pred_check_branch
    %184 = sbr.rel (0) target = $region17
  $region16: #{clip_fe_forward.13} parent=0 // pred_region
    _
  $region17: #{clip_fe_forward.13} parent=0 // pred_fallthru
    _
  // Predicated region
  $region18: #{clip_fe_forward.13} parent=0 // pred_check
    _
  $region19: #{clip_fe_forward.13} parent=0 // pred_check_branch
    %186 = sbr.rel (0) target = $region21
  $region20: #{clip_fe_forward.13} parent=0 // pred_region
    _
  $region21: #{clip_fe_forward.13} parent=0 // pred_fallthru
    _

// kernel: clip_fe_forward.12
$region0: #{clip_fe_forward.12}
  #allocation0 [shape = 'u32[]', space=smem, size = 0x4, offset = 0x4, fixed_abs, tag = 'smem constant byte address 0x4 - core index']
  #allocation1 [shape = 'u32[72,128]{1,0:T(1,128)}', space=vmem, size = 0x9000, scoped, tag = 'internal scratch']
  %s0 = inlined_call_operand.vmem [shape: bf16[8,128], index: 0, kind: input, shape index: {}]
  %s1 = inlined_call_operand.vmem [shape: bf16[128,128], index: 1, kind: input, shape index: {}]
  %s2 = inlined_call_operand.vmem [shape: f32[1,128], index: 2, kind: input, shape index: {}]
  %s3 = inlined_call_operand.vmem [shape: bf16[8,128], index: 3, kind: output, shape index: {}]
  %s4 = sld [smem:[#allocation0]]
  $region22: #{clip_fe_forward.12} parent=0
    _
  %s6 = ssub.s32 1, %s4
  %s7 = scalar_select 0, %s6, %s4
  // Predicated region
  $region2: #{clip_fe_forward.12} parent=0 // pred_check
    _
  $region3: #{clip_fe_forward.12} parent=0 // pred_check_branch
    %9 = sbr.rel (0) target = $region5
  $region4: #{clip_fe_forward.12} parent=0 // pred_region
    _
  $region5: #{clip_fe_forward.12} parent=0 // pred_fallthru
    _
  // Predicated region
  $region6: #{clip_fe_forward.12} parent=0 // pred_check
    _
  $region7: #{clip_fe_forward.12} parent=0 // pred_check_branch
    %11 = sbr.rel (0) target = $region9
  $region8: #{clip_fe_forward.12} parent=0 // pred_region
    _
  $region9: #{clip_fe_forward.12} parent=0 // pred_fallthru
    _
  // Predicated region
  $region10: #{clip_fe_forward.12} parent=0 // pred_check
    _
  $region11: #{clip_fe_forward.12} parent=0 // pred_check_branch
    %13 = sbr.rel (0) target = $region13
  $region12: #{clip_fe_forward.12} parent=0 // pred_region
    _
  $region13: #{clip_fe_forward.12} parent=0 // pred_fallthru
    _
  %v14 = vld [vmem:[%s0] sm:$0xf]
  %v15 = vld [vmem:[%s1] sm:$0xf]
  %v16 = vld [vmem:[%s1 + $0x4] sm:$0xf]
  %v17 = vld [vmem:[%s1 + $0x8] sm:$0xf]
  %v18 = vld [vmem:[%s1 + $0xc] sm:$0xf]
  %v19 = vld [vmem:[%s1 + $0x10] sm:$0xf]
  %v20 = vld [vmem:[%s1 + $0x14] sm:$0xf]
  %v21 = vld [vmem:[%s1 + $0x18] sm:$0xf]
  %v22 = vld [vmem:[%s1 + $0x1c] sm:$0xf]
  %v23 = vld [vmem:[%s1 + $0x20] sm:$0xf]
  %v24 = vld [vmem:[%s1 + $0x24] sm:$0xf]
  %v25 = vld [vmem:[%s1 + $0x28] sm:$0xf]
  %v26 = vld [vmem:[%s1 + $0x2c] sm:$0xf]
  %v27 = vld [vmem:[%s1 + $0x30] sm:$0xf]
  %v28 = vld [vmem:[%s1 + $0x34] sm:$0xf]
  %v29 = vld [vmem:[%s1 + $0x38] sm:$0xf]
  %v30 = vld [vmem:[%s1 + $0x3c] sm:$0xf]
  %v31 = vld [vmem:[%s2] sm:$0x1]
  %v33 = vperm.slane %v31, 0
  %v51 = vunpack.c.l.b16 %v15
  %v52 = vunpack.c.l.b16 %v16
  %v53 = vunpack.c.l.b16 %v17
  %v54 = vunpack.c.l.b16 %v18
  %v55 = vunpack.c.l.b16 %v19
  %v56 = vunpack.c.l.b16 %v20
  %v57 = vunpack.c.l.b16 %v21
  %v58 = vunpack.c.l.b16 %v22
  %v59 = vunpack.c.l.b16 %v23
  %v60 = vunpack.c.l.b16 %v24
  %v61 = vunpack.c.l.b16 %v25
  %v62 = vunpack.c.l.b16 %v26
  %v63 = vunpack.c.l.b16 %v27
  %v64 = vunpack.c.l.b16 %v28
  %v65 = vunpack.c.l.b16 %v29
  %v66 = vunpack.c.l.b16 %v30
  %v67 = vpack.c.b16 %v52, %v51
  %v68 = vpack.c.b16 %v54, %v53
  %v69 = vpack.c.b16 %v56, %v55
  %v70 = vpack.c.b16 %v58, %v57
  %v71 = vpack.c.b16 %v60, %v59
  %v72 = vpack.c.b16 %v62, %v61
  %v73 = vpack.c.b16 %v64, %v63
  %v74 = vpack.c.b16 %v66, %v65
  %83 = vmatpush.bf16.msra.mxu0 %v74
  %84 = vmatpush.bf16.msra.mxu0 %v73
  %85 = vmatpush.bf16.msra.mxu0 %v72
  %86 = vmatpush.bf16.msra.mxu0 %v71
  %87 = vmatpush.bf16.msra.mxu0 %v70
  %88 = vmatpush.bf16.msra.mxu0 %v69
  %89 = vmatpush.bf16.msra.mxu0 %v68
  %90 = vmatpush.bf16.msra.mxu0 %v67
  %91 = vmatmul.bf16.gmra.mxu0 %v14
  %v92 = vpop.f32.mrf.mxu0
  %v93 = vadd.f32 %v33, %v92
  %v94 = vpop.f32.mrf.mxu0
  %95 = vdwg.mxu0
  %v96 = vpack.c.bf16 %v93, %v93
  %97 = vst [vmem:[%s3] sm:$0xf] %v96
  // Predicated region
  $region14: #{clip_fe_forward.12} parent=0 // pred_check
    _
  $region15: #{clip_fe_forward.12} parent=0 // pred_check_branch
    %99 = sbr.rel (0) target = $region17
  $region16: #{clip_fe_forward.12} parent=0 // pred_region
    _
  $region17: #{clip_fe_forward.12} parent=0 // pred_fallthru
    _
  // Predicated region
  $region18: #{clip_fe_forward.12} parent=0 // pred_check
    _
  $region19: #{clip_fe_forward.12} parent=0 // pred_check_branch
    %101 = sbr.rel (0) target = $region21
  $region20: #{clip_fe_forward.12} parent=0 // pred_region
    _
  $region21: #{clip_fe_forward.12} parent=0 // pred_fallthru
    _

// kernel: clip_fe_forward.15
$region0: #{clip_fe_forward.15}
  #allocation0 [shape = 'u32[]', space=smem, size = 0x4, offset = 0x4, fixed_abs, tag = 'smem constant byte address 0x4 - core index']
  #allocation1 [shape = 'u32[72,128]{1,0:T(1,128)}', space=vmem, size = 0x9000, scoped, tag = 'internal scratch']
  %s0 = inlined_call_operand.vmem [shape: bf16[2,4,128], index: 0, kind: input, shape index: {}]
  %s1 = inlined_call_operand.hbm [shape: f32[2,1,128], index: 1, kind: output, shape index: {}]
  %s2 = sld [smem:[#allocation0]]
  $region37: #{clip_fe_forward.15} parent=0
    _
  %s4 = ssub.s32 1, %s2
  %s5 = scalar_select 0, %s4, %s2
  $region1: #{clip_fe_forward.15} parent=0
    #allocation2 [shape = 'u8[1024]{0}', space=vmem, size = 0x400, scoped, tag = 'output window, operand 0']
    #allocation3 [shape = 's32[2]{0}', space=sflag, size = 0x8, scoped, tag = 'scoped memory for clip_fe_forward.15']
    %6 = vsyncpa [#allocation3], 0
    %s7 = scalar_lea.sflag [#allocation3], 1
    %8 = vsyncpa %s7, 0
    loop: start=0, step=1, limit=4
    $region2: #{clip_fe_forward.15} parent=1 // loop_pre_header
      _
    $region3: #{clip_fe_forward.15} parent=1 // loop_header
      %s10 = sphi 0, %s14
      %p11 = scmp.ge.s32.totalorder %s10, 4
      %s20 = sphi 0, %s22
      %s23 = sphi 0, %s20
      %s24 = sphi 0, %s23
      %s40 = sphi 0, %s24
      %s46 = sphi 0, %s48
      %s49 = sphi 0, %s46
      %s50 = sphi 0, %s49
      %s66 = sphi 0, %s50
    $region4: #{clip_fe_forward.15} parent=1 // loop_header_branch
      %13 = sbr.rel (%p11) target = $region8
    $region5: #{clip_fe_forward.15} parent=1 // loop_body
      %s15 = ssub.s32 %s10, 1
      %s16 = ssub.s32 %s10, 2
      %s17 = sadd.s32 %s10, 1
      %s18 = ssub.s32 %s10, %s17
      %p19 = scmp.eq.s32.totalorder %s18, 0
      %s21 = sadd.s32 %s20, 1
      %s22 = scalar_select %p19, %s20, %s21
      %p25 = pneg %p19
      %p26 = scmp.eq.s32.totalorder %s10, 1
      %p27 = por %p25, %p26
      %p28 = scmp.ne.s32.totalorder %s20, %s23
      %p29 = scmp.eq.s32.totalorder %s10, 0
      %p30 = por %p28, %p29
      %p31 = scmp.ne.s32.totalorder %s20, %s23
      %p32 = scmp.eq.s32.totalorder %s15, 1
      %p33 = por %p31, %p32
      %p34 = scmp.ne.s32.totalorder %s23, %s24
      %p35 = scmp.eq.s32.totalorder %s15, 0
      %p36 = por %p34, %p35
      %p37 = scmp.ne.s32.totalorder %s23, %s24
      %p38 = scmp.eq.s32.totalorder %s16, 1
      %p39 = por %p37, %p38
      %p41 = scmp.ne.s32.totalorder %s24, %s40
      %p42 = scmp.eq.s32.totalorder %s16, 0
      %p43 = por %p41, %p42
      %s44 = ssub.s32 %s10, %s17
      %p45 = scmp.eq.s32.totalorder %s44, 0
      %s47 = sadd.s32 %s46, 1
      %s48 = scalar_select %p45, %s46, %s47
      %p51 = pneg %p45
      %p52 = scmp.eq.s32.totalorder %s10, 1
      %p53 = por %p51, %p52
      %p54 = scmp.ne.s32.totalorder %s46, %s49
      %p55 = scmp.eq.s32.totalorder %s10, 0
      %p56 = por %p54, %p55
      %p57 = scmp.ne.s32.totalorder %s46, %s49
      %p58 = scmp.eq.s32.totalorder %s15, 1
      %p59 = por %p57, %p58
      %p60 = scmp.ne.s32.totalorder %s49, %s50
      %p61 = scmp.eq.s32.totalorder %s15, 0
      %p62 = por %p60, %p61
      %p63 = scmp.ne.s32.totalorder %s49, %s50
      %p64 = scmp.eq.s32.totalorder %s16, 1
      %p65 = por %p63, %p64
      %p67 = scmp.ne.s32.totalorder %s50, %s66
      %p68 = scmp.eq.s32.totalorder %s16, 0
      %p69 = por %p67, %p68
      %p70 = scmp.le.s32.totalorder 1, %s10
      %p71 = scmp.lt.s32.totalorder %s10, 3
      %p72 = pnand %p70, %p71
      %p73 = pneg %p72
      // Predicated region
      $region9: #{clip_fe_forward.15} parent=5 // pred_check
        _
      $region10: #{clip_fe_forward.15} parent=5 // pred_check_branch
        %75 = sbr.rel (%p72) target = $region12
      $region11: #{clip_fe_forward.15} parent=5 // pred_region
        %s76 = ssub.s32 %s10, 1
      $region12: #{clip_fe_forward.15} parent=5 // pred_fallthru
        _
      %p77 = scmp.lt.s32.totalorder %s10, 2
      // Predicated region
      $region13: #{clip_fe_forward.15} parent=5 // pred_check
        %p78 = pneg %p77
      $region14: #{clip_fe_forward.15} parent=5 // pred_check_branch
        %80 = sbr.rel (%p78) target = $region16
      $region15: #{clip_fe_forward.15} parent=5 // pred_region
        // Predicated region
        $region17: #{clip_fe_forward.15} parent=15 // pred_check
          %p81 = pneg %p30
        $region18: #{clip_fe_forward.15} parent=15 // pred_check_branch
          %83 = sbr.rel (%p81) target = $region20
        $region19: #{clip_fe_forward.15} parent=15 // pred_region
          %p84 = scmp.lt.s32.totalorder %s10, 1
          %s85 = scalar_select %p84, %s10, 1
          %s86 = smul.addr %s85, 2
          %s87 = scalar_lea.vmem %s0, %s86
        $region20: #{clip_fe_forward.15} parent=15 // pred_fallthru
          _
      $region16: #{clip_fe_forward.15} parent=5 // pred_fallthru
        _
      %p88 = scmp.le.s32.totalorder 1, %s10
      %p89 = scmp.lt.s32.totalorder %s10, 3
      %p90 = pnand %p88, %p89
      %p91 = pneg %p90
      // Predicated region
      $region21: #{clip_fe_forward.15} parent=5 // pred_check
        _
      $region22: #{clip_fe_forward.15} parent=5 // pred_check_branch
        %93 = sbr.rel (%p90) target = $region24
      $region23: #{clip_fe_forward.15} parent=5 // pred_region
        %s94 = ssub.s32 %s10, 1
        %p95 = scmp.lt.s32.totalorder %s15, 1
        %s96 = scalar_select %p95, %s15, 1
        %s97 = smul.addr %s96, 2
        %s98 = scalar_lea.vmem %s0, %s97
        %p99 = pneg %p36
        %p100 = pneg %p33
        %p101 = pneg %p62
        %p102 = pneg %p59
        %s103 = sand.u32 %s49, 1
        %s104 = scalar_lea.sflag [#allocation3], %s103
        %s105 = sand.u32 %s49, 1
        %s106 = scalar_lea.vmem [#allocation2], %s105
        %p107 = scmp.lt.s32.totalorder %s15, 1
        %s108 = scalar_select %p107, %s15, 1
        %s109 = smul.addr %s108, 2
        %s110 = scalar_lea.vmem %s0, %s109
        %v111 = vld [vmem:[%s110] sm:$0x3]
        %v112 = vunpack.c.l.bf16 %v111
        %vm113 = vcmask 1043456
        %v114 = vsel %vm113, %v112, 0.0
        %v115 = vrot.slane %v114, 4
        %v116 = vadd.f32 %v114, %v115
        %v117 = vrot.slane %v116, 2
        %v118 = vadd.f32 %v116, %v117
        %v119 = vrot.slane %v118, 1
        %v120 = vadd.f32 %v118, %v119
        %v121 = vrcp.pop 4.0
        %v122 = vmul.f32 4.0, %v121
        %v123 = vsub.f32 1.0, %v122
        %v124 = vmul.f32 %v121, %v123
        %v125 = vadd.f32 %v121, %v124
        %vm126 = vweird.f32 %v121
        %v127 = vsel %vm126, %v121, %v125
        %v128 = vmul.f32 %v120, %v127
        %129 = vst [vmem:[%s106] sm:$0x1] %v128
        %s130 = sand.u32 %s49, 1
        %s131 = scalar_lea.sflag [#allocation3], %s130
        %s132 = sand.u32 %s49, 1
        %s133 = scalar_lea.vmem [#allocation2], %s132
        // Predicated region
        $region25: #{clip_fe_forward.15} parent=23 // pred_check
          %p134 = pneg %p59
        $region26: #{clip_fe_forward.15} parent=23 // pred_check_branch
          %136 = sbr.rel (%p134) target = $region28
        $region27: #{clip_fe_forward.15} parent=23 // pred_region
          %138 = vsyncadd %s131, 0
          %s139 = scalar_lea.hbm %s1, %s15
          %s141 = sshll.u32 %s133, 4
          %s142 = int_to_ptr.vmem [resolvable:$true] %s141
          %s143 = sshll.u32 %s139, 4
          %s144 = int_to_ptr.hbm [resolvable:$true] %s143
          %146 = dma.vmem_to_hbm [thread:$0]  %s142, 16, %s144, %s131
        $region28: #{clip_fe_forward.15} parent=23 // pred_fallthru
          _
      $region24: #{clip_fe_forward.15} parent=5 // pred_fallthru
        _
      %p147 = scmp.le.s32.totalorder 2, %s10
      // Predicated region
      $region29: #{clip_fe_forward.15} parent=5 // pred_check
        %p148 = pneg %p147
      $region30: #{clip_fe_forward.15} parent=5 // pred_check_branch
        %150 = sbr.rel (%p148) target = $region32
      $region31: #{clip_fe_forward.15} parent=5 // pred_region
        %s151 = ssub.s32 %s10, 2
        // Predicated region
        $region33: #{clip_fe_forward.15} parent=31 // pred_check
          %p152 = pneg %p65
        $region34: #{clip_fe_forward.15} parent=31 // pred_check_branch
          %154 = sbr.rel (%p152) target = $region36
        $region35: #{clip_fe_forward.15} parent=31 // pred_region
          %s155 = sand.u32 %s50, 1
          %s156 = scalar_lea.sflag [#allocation3], %s155
          %s157 = sand.u32 %s50, 1
          %s158 = scalar_lea.vmem [#allocation2], %s157
          %160 = dma.done %s156, 16
        $region36: #{clip_fe_forward.15} parent=31 // pred_fallthru
          _
      $region32: #{clip_fe_forward.15} parent=5 // pred_fallthru
        _
    $region6: #{clip_fe_forward.15} parent=1 // loop_footer
      %s14 = sadd.s32 1, %s10
    $region7: #{clip_fe_forward.15} parent=1 // loop_footer_branch
      %9 = sbr.rel target = $region3
    $region8: #{clip_fe_forward.15} parent=1 // loop_exit
      _
    %161 = vsyncpa [#allocation3], 1
    %s162 = scalar_lea.sflag [#allocation3], 1
    %163 = vsyncpa %s162, 1

// kernel: clip_fe_forward.14
$region0: #{clip_fe_forward.14}
  #allocation0 [shape = 'u32[]', space=smem, size = 0x4, offset = 0x4, fixed_abs, tag = 'smem constant byte address 0x4 - core index']
  #allocation1 [shape = 'u32[72,128]{1,0:T(1,128)}', space=vmem, size = 0x9000, scoped, tag = 'internal scratch']
  %s0 = inlined_call_operand.vmem [shape: bf16[8,384], index: 0, kind: input, shape index: {}]
  %s1 = inlined_call_operand.vmem [shape: bf16[384,128], index: 1, kind: input, shape index: {}]
  %s2 = inlined_call_operand.vmem [shape: f32[1,128], index: 2, kind: input, shape index: {}]
  %s3 = inlined_call_operand.vmem [shape: bf16[8,128], index: 3, kind: input, shape index: {}]
  %s4 = inlined_call_operand.vmem [shape: bf16[8,128], index: 4, kind: output, shape index: {}]
  %s5 = sld [smem:[#allocation0]]
  $region26: #{clip_fe_forward.14} parent=0
    _
  %s7 = ssub.s32 1, %s5
  %s8 = scalar_select 0, %s7, %s5
  // Predicated region
  $region2: #{clip_fe_forward.14} parent=0 // pred_check
    _
  $region3: #{clip_fe_forward.14} parent=0 // pred_check_branch
    %10 = sbr.rel (0) target = $region5
  $region4: #{clip_fe_forward.14} parent=0 // pred_region
    _
  $region5: #{clip_fe_forward.14} parent=0 // pred_fallthru
    _
  // Predicated region
  $region6: #{clip_fe_forward.14} parent=0 // pred_check
    _
  $region7: #{clip_fe_forward.14} parent=0 // pred_check_branch
    %12 = sbr.rel (0) target = $region9
  $region8: #{clip_fe_forward.14} parent=0 // pred_region
    _
  $region9: #{clip_fe_forward.14} parent=0 // pred_fallthru
    _
  // Predicated region
  $region10: #{clip_fe_forward.14} parent=0 // pred_check
    _
  $region11: #{clip_fe_forward.14} parent=0 // pred_check_branch
    %14 = sbr.rel (0) target = $region13
  $region12: #{clip_fe_forward.14} parent=0 // pred_region
    _
  $region13: #{clip_fe_forward.14} parent=0 // pred_fallthru
    _
  // Predicated region
  $region14: #{clip_fe_forward.14} parent=0 // pred_check
    _
  $region15: #{clip_fe_forward.14} parent=0 // pred_check_branch
    %16 = sbr.rel (0) target = $region17
  $region16: #{clip_fe_forward.14} parent=0 // pred_region
    _
  $region17: #{clip_fe_forward.14} parent=0 // pred_fallthru
    _
  %v17 = vld [vmem:[%s0] sm:$0xff]
  %v18 = vld [vmem:[%s0 + $0x8] sm:$0xf]
  %v19 = vld [vmem:[%s1] sm:$0xf]
  %v20 = vld [vmem:[%s1 + $0x4] sm:$0xf]
  %v21 = vld [vmem:[%s1 + $0x8] sm:$0xf]
  %v22 = vld [vmem:[%s1 + $0xc] sm:$0xf]
  %v23 = vld [vmem:[%s1 + $0x10] sm:$0xf]
  %v24 = vld [vmem:[%s1 + $0x14] sm:$0xf]
  %v25 = vld [vmem:[%s1 + $0x18] sm:$0xf]
  %v26 = vld [vmem:[%s1 + $0x1c] sm:$0xf]
  %v27 = vld [vmem:[%s1 + $0x20] sm:$0xf]
  %v28 = vld [vmem:[%s1 + $0x24] sm:$0xf]
  %v29 = vld [vmem:[%s1 + $0x28] sm:$0xf]
  %v30 = vld [vmem:[%s1 + $0x2c] sm:$0xf]
  %v31 = vld [vmem:[%s1 + $0x30] sm:$0xf]
  %v32 = vld [vmem:[%s1 + $0x34] sm:$0xf]
  %v33 = vld [vmem:[%s1 + $0x38] sm:$0xf]
  %v34 = vld [vmem:[%s1 + $0x3c] sm:$0xf]
  %v35 = vld [vmem:[%s1 + $0x40] sm:$0xf]
  %v36 = vld [vmem:[%s1 + $0x44] sm:$0xf]
  %v37 = vld [vmem:[%s1 + $0x48] sm:$0xf]
  %v38 = vld [vmem:[%s1 + $0x4c] sm:$0xf]
  %v39 = vld [vmem:[%s1 + $0x50] sm:$0xf]
  %v40 = vld [vmem:[%s1 + $0x54] sm:$0xf]
  %v41 = vld [vmem:[%s1 + $0x58] sm:$0xf]
  %v42 = vld [vmem:[%s1 + $0x5c] sm:$0xf]
  %v43 = vld [vmem:[%s1 + $0x60] sm:$0xf]
  %v44 = vld [vmem:[%s1 + $0x64] sm:$0xf]
  %v45 = vld [vmem:[%s1 + $0x68] sm:$0xf]
  %v46 = vld [vmem:[%s1 + $0x6c] sm:$0xf]
  %v47 = vld [vmem:[%s1 + $0x70] sm:$0xf]
  %v48 = vld [vmem:[%s1 + $0x74] sm:$0xf]
  %v49 = vld [vmem:[%s1 + $0x78] sm:$0xf]
  %v50 = vld [vmem:[%s1 + $0x7c] sm:$0xf]
  %v51 = vld [vmem:[%s1 + $0x80] sm:$0xf]
  %v52 = vld [vmem:[%s1 + $0x84] sm:$0xf]
  %v53 = vld [vmem:[%s1 + $0x88] sm:$0xf]
  %v54 = vld [vmem:[%s1 + $0x8c] sm:$0xf]
  %v55 = vld [vmem:[%s1 + $0x90] sm:$0xf]
  %v56 = vld [vmem:[%s1 + $0x94] sm:$0xf]
  %v57 = vld [vmem:[%s1 + $0x98] sm:$0xf]
  %v58 = vld [vmem:[%s1 + $0x9c] sm:$0xf]
  %v59 = vld [vmem:[%s1 + $0xa0] sm:$0xf]
  %v60 = vld [vmem:[%s1 + $0xa4] sm:$0xf]
  %v61 = vld [vmem:[%s1 + $0xa8] sm:$0xf]
  %v62 = vld [vmem:[%s1 + $0xac] sm:$0xf]
  %v63 = vld [vmem:[%s1 + $0xb0] sm:$0xf]
  %v64 = vld [vmem:[%s1 + $0xb4] sm:$0xf]
  %v65 = vld [vmem:[%s1 + $0xb8] sm:$0xf]
  %v66 = vld [vmem:[%s1 + $0xbc] sm:$0xf]
  %v67 = vld [vmem:[%s2] sm:$0x1]
  %v69 = vperm.slane %v67, 0
  %v73 = vunpack.c.l.b16 %v17
  %v74 = vunpack.c.h.b16 %v17
  %v75 = vunpack.c.l.b16 %v18
  %v76 = vpack.c.b16 %v73, %v73
  %v77 = vpack.c.b16 %v74, %v74
  %v78 = vpack.c.b16 %v75, %v75
  %v130 = vunpack.c.l.b16 %v19
  %v131 = vunpack.c.l.b16 %v20
  %v132 = vunpack.c.l.b16 %v21
  %v133 = vunpack.c.l.b16 %v22
  %v134 = vunpack.c.l.b16 %v23
  %v135 = vunpack.c.l.b16 %v24
  %v136 = vunpack.c.l.b16 %v25
  %v137 = vunpack.c.l.b16 %v26
  %v138 = vunpack.c.l.b16 %v27
  %v139 = vunpack.c.l.b16 %v28
  %v140 = vunpack.c.l.b16 %v29
  %v141 = vunpack.c.l.b16 %v30
  %v142 = vunpack.c.l.b16 %v31
  %v143 = vunpack.c.l.b16 %v32
  %v144 = vunpack.c.l.b16 %v33
  %v145 = vunpack.c.l.b16 %v34
  %v146 = vunpack.c.l.b16 %v35
  %v147 = vunpack.c.l.b16 %v36
  %v148 = vunpack.c.l.b16 %v37
  %v149 = vunpack.c.l.b16 %v38
  %v150 = vunpack.c.l.b16 %v39
  %v151 = vunpack.c.l.b16 %v40
  %v152 = vunpack.c.l.b16 %v41
  %v153 = vunpack.c.l.b16 %v42
  %v154 = vunpack.c.l.b16 %v43
  %v155 = vunpack.c.l.b16 %v44
  %v156 = vunpack.c.l.b16 %v45
  %v157 = vunpack.c.l.b16 %v46
  %v158 = vunpack.c.l.b16 %v47
  %v159 = vunpack.c.l.b16 %v48
  %v160 = vunpack.c.l.b16 %v49
  %v161 = vunpack.c.l.b16 %v50
  %v162 = vunpack.c.l.b16 %v51
  %v163 = vunpack.c.l.b16 %v52
  %v164 = vunpack.c.l.b16 %v53
  %v165 = vunpack.c.l.b16 %v54
  %v166 = vunpack.c.l.b16 %v55
  %v167 = vunpack.c.l.b16 %v56
  %v168 = vunpack.c.l.b16 %v57
  %v169 = vunpack.c.l.b16 %v58
  %v170 = vunpack.c.l.b16 %v59
  %v171 = vunpack.c.l.b16 %v60
  %v172 = vunpack.c.l.b16 %v61
  %v173 = vunpack.c.l.b16 %v62
  %v174 = vunpack.c.l.b16 %v63
  %v175 = vunpack.c.l.b16 %v64
  %v176 = vunpack.c.l.b16 %v65
  %v177 = vunpack.c.l.b16 %v66
  %v178 = vpack.c.b16 %v131, %v130
  %v179 = vpack.c.b16 %v133, %v132
  %v180 = vpack.c.b16 %v135, %v134
  %v181 = vpack.c.b16 %v137, %v136
  %v182 = vpack.c.b16 %v139, %v138
  %v183 = vpack.c.b16 %v141, %v140
  %v184 = vpack.c.b16 %v143, %v142
  %v185 = vpack.c.b16 %v145, %v144
  %v186 = vpack.c.b16 %v147, %v146
  %v187 = vpack.c.b16 %v149, %v148
  %v188 = vpack.c.b16 %v151, %v150
  %v189 = vpack.c.b16 %v153, %v152
  %v190 = vpack.c.b16 %v155, %v154
  %v191 = vpack.c.b16 %v157, %v156
  %v192 = vpack.c.b16 %v159, %v158
  %v193 = vpack.c.b16 %v161, %v160
  %v194 = vpack.c.b16 %v163, %v162
  %v195 = vpack.c.b16 %v165, %v164
  %v196 = vpack.c.b16 %v167, %v166
  %v197 = vpack.c.b16 %v169, %v168
  %v198 = vpack.c.b16 %v171, %v170
  %v199 = vpack.c.b16 %v173, %v172
  %v200 = vpack.c.b16 %v175, %v174
  %v201 = vpack.c.b16 %v177, %v176
  %226 = vmatpush.bf16.msra.mxu0 %v185
  %227 = vmatpush.bf16.msra.mxu0 %v184
  %228 = vmatpush.bf16.msra.mxu0 %v183
  %229 = vmatpush.bf16.msra.mxu0 %v182
  %230 = vmatpush.bf16.msra.mxu0 %v181
  %231 = vmatpush.bf16.msra.mxu0 %v180
  %232 = vmatpush.bf16.msra.mxu0 %v179
  %233 = vmatpush.bf16.msra.mxu0 %v178
  %234 = vmatmul.bf16.gmra.mxu0 %v76
  %v235 = vpop.f32.mrf.mxu0
  %v236 = vadd.f32 %v69, %v235
  %v237 = vpop.f32.mrf.mxu0
  %238 = vdwg.mxu0
  %239 = vmatpush.bf16.msra.mxu0 %v193
  %240 = vmatpush.bf16.msra.mxu0 %v192
  %241 = vmatpush.bf16.msra.mxu0 %v191
  %242 = vmatpush.bf16.msra.mxu0 %v190
  %243 = vmatpush.bf16.msra.mxu0 %v189
  %244 = vmatpush.bf16.msra.mxu0 %v188
  %245 = vmatpush.bf16.msra.mxu0 %v187
  %246 = vmatpush.bf16.msra.mxu0 %v186
  %247 = vmatmul.bf16.gmra.mxu0 %v77
  %v248 = vpop.f32.mrf.mxu0
  %v249 = vadd.f32 %v236, %v248
  %v250 = vpop.f32.mrf.mxu0
  %251 = vdwg.mxu0
  %252 = vmatpush.bf16.msra.mxu0 %v201
  %253 = vmatpush.bf16.msra.mxu0 %v200
  %254 = vmatpush.bf16.msra.mxu0 %v199
  %255 = vmatpush.bf16.msra.mxu0 %v198
  %256 = vmatpush.bf16.msra.mxu0 %v197
  %257 = vmatpush.bf16.msra.mxu0 %v196
  %258 = vmatpush.bf16.msra.mxu0 %v195
  %259 = vmatpush.bf16.msra.mxu0 %v194
  %260 = vmatmul.bf16.gmra.mxu0 %v78
  %v261 = vpop.f32.mrf.mxu0
  %v262 = vadd.f32 %v249, %v261
  %v263 = vpop.f32.mrf.mxu0
  %264 = vdwg.mxu0
  %v265 = vld [vmem:[%s3] sm:$0xf]
  %v266 = vunpack.c.l.bf16 %v265
  %v267 = vadd.f32 %v262, %v266
  %v268 = vmax.f32 %v267, 0.0
  %v269 = vpack.c.bf16 %v268, %v268
  %270 = vst [vmem:[%s4] sm:$0xf] %v269
  // Predicated region
  $region18: #{clip_fe_forward.14} parent=0 // pred_check
    _
  $region19: #{clip_fe_forward.14} parent=0 // pred_check_branch
    %272 = sbr.rel (0) target = $region21
  $region20: #{clip_fe_forward.14} parent=0 // pred_region
    _
  $region21: #{clip_fe_forward.14} parent=0 // pred_fallthru
    _
  // Predicated region
  $region22: #{clip_fe_forward.14} parent=0 // pred_check
    _
  $region23: #{clip_fe_forward.14} parent=0 // pred_check_branch
    %274 = sbr.rel (0) target = $region25
  $region24: #{clip_fe_forward.14} parent=0 // pred_region
    _
  $region25: #{clip_fe_forward.14} parent=0 // pred_fallthru
    _

</llo_original>
